<compile_context>
chip_gen: v7x
topology: tpu7x:2x2x1
jax: 0.10.0
libtpu: 0.0.40
codegen_flags: <defaults>
</compile_context>

<pallas_src>
import numpy as np
import jax
import jax.numpy as jnp
from jax.experimental import pallas as pl
from jax.experimental.pallas import tpu as pltpu


def _round_up(x, m):
    return (x + m - 1) // m * m


def _lstm_recurrence_kernel(bs_ref, gx_ref, h0_ref, c0_ref, whh_ref,
                            y_ref, hT_ref, cT_ref, h_scr, c_scr):
    b_blk = pl.program_id(0)              # batch-block axis ("parallel")
    chunk = pl.program_id(1)              # time-chunk axis ("arbitrary")
    n_chunks = pl.num_programs(1)

    Tc = gx_ref.shape[0]
    Bb, Hp = h_scr.shape

    @pl.when(chunk == 0)
    def _():
        h_scr[...] = h0_ref[...].astype(jnp.float32)
        c_scr[...] = c0_ref[...].astype(jnp.float32)

    whh = whh_ref[...]                    # (Hp, 4Hp), bf16 (matmul dtype)

    # Hoisted once per chunk: global batch-row index for packed-seq masking.
    row = jax.lax.broadcasted_iota(jnp.int32, (Bb, Hp), 0) + b_blk * Bb

    def step(i, carry):
        t = chunk * Tc + i
        h_prev = h_scr[...]               # (Bb, Hp) f32
        c_prev = c_scr[...]               # (Bb, Hp) f32

        # gates_x (x-projection + bias) was precomputed outside the kernel.
        gates = gx_ref[i].astype(jnp.float32) + jnp.dot(
            h_prev.astype(whh.dtype), whh, preferred_element_type=jnp.float32)

        i_g = jax.nn.sigmoid(gates[:, 0 * Hp:1 * Hp])
        f_g = jax.nn.sigmoid(gates[:, 1 * Hp:2 * Hp])
        g_g = jnp.tanh(gates[:, 2 * Hp:3 * Hp])
        o_g = jax.nn.sigmoid(gates[:, 3 * Hp:4 * Hp])

        c_cand = f_g * c_prev + i_g * g_g
        h_cand = o_g * jnp.tanh(c_cand)

        # Packed-sequence masking: rows >= batch_sizes[t] stay unchanged.
        active = row < bs_ref[t]
        h_new = jnp.where(active, h_cand, h_prev)
        c_new = jnp.where(active, c_cand, c_prev)

        h_scr[...] = h_new
        c_scr[...] = c_new
        y_ref[i] = h_new.astype(y_ref.dtype)
        return carry

    jax.lax.fori_loop(0, Tc, step, 0, unroll=True)

    @pl.when(chunk == n_chunks - 1)
    def _():
        hT_ref[...] = h_scr[...].astype(hT_ref.dtype)
        cT_ref[...] = c_scr[...].astype(cT_ref.dtype)


def lstm_recurrence_pallas(gx, h0p, c0p, whh_t, batch_sizes_padded,
                           *, time_chunk, batch_block, out_dtype):
    """gx: (Tp, Bp, 4Hp) f32 precomputed x-gates; h0p/c0p: (Bp, Hp) f32;
    whh_t: (Hp, 4Hp) matmul dtype."""
    Tp, Bp, G4 = gx.shape
    Hp = h0p.shape[-1]
    assert G4 == 4 * Hp and Tp % time_chunk == 0 and Bp % batch_block == 0
    n_chunks = Tp // time_chunk
    n_bblocks = Bp // batch_block
    bs = jnp.asarray(batch_sizes_padded, dtype=jnp.int32)

    grid_spec = pltpu.PrefetchScalarGridSpec(
        num_scalar_prefetch=1,
        grid=(n_bblocks, n_chunks),
        in_specs=[
            pl.BlockSpec((time_chunk, batch_block, 4 * Hp),
                         lambda b, c, bs: (c, b, 0)),
            pl.BlockSpec((batch_block, Hp), lambda b, c, bs: (b, 0)),
            pl.BlockSpec((batch_block, Hp), lambda b, c, bs: (b, 0)),
            pl.BlockSpec((Hp, 4 * Hp), lambda b, c, bs: (0, 0)),
        ],
        out_specs=[
            pl.BlockSpec((time_chunk, batch_block, Hp),
                         lambda b, c, bs: (c, b, 0)),
            pl.BlockSpec((batch_block, Hp), lambda b, c, bs: (b, 0)),
            pl.BlockSpec((batch_block, Hp), lambda b, c, bs: (b, 0)),
        ],
        scratch_shapes=[pltpu.VMEM((batch_block, Hp), jnp.float32),
                        pltpu.VMEM((batch_block, Hp), jnp.float32)],
    )

    y_pad, hT, cT = pl.pallas_call(
        _lstm_recurrence_kernel,
        grid_spec=grid_spec,
        out_shape=(jax.ShapeDtypeStruct((Tp, Bp, Hp), out_dtype),
                   jax.ShapeDtypeStruct((Bp, Hp), out_dtype),
                   jax.ShapeDtypeStruct((Bp, Hp), out_dtype)),
        compiler_params=pltpu.CompilerParams(
            dimension_semantics=("parallel", "arbitrary"),
            vmem_limit_bytes=32 * 1024 * 1024),
    )(bs, gx, h0p, c0p, whh_t)
    return y_pad, hT, cT


class WrappedLSTMPallas:
    """Mirrors WrappedLSTM with input_module=None, output_module=None."""

    def __init__(self, lstm_input_size, lstm_hidden_size, num_layers=1,
                 key=None, matmul_dtype=jnp.bfloat16):
        # TODO(synk): num_layers > 1 and arbitrary input/output nn.Modules not
        # implemented (PyTorch defaults are None -> identity).
        assert num_layers == 1
        self.I = lstm_input_size
        self.H = lstm_hidden_size
        self.Hp = _round_up(lstm_hidden_size, 128)   # lane-aligned hidden size
        self.matmul_dtype = matmul_dtype

        k = 1.0 / np.sqrt(lstm_hidden_size)
        keys = jax.random.split(key, 4)
        u = lambda kk, shape: jax.random.uniform(kk, shape, jnp.float32, -k, k)
        self.W_ih = u(keys[0], (4 * self.H, self.I))
        self.W_hh = u(keys[1], (4 * self.H, self.H))
        self.b_ih = u(keys[2], (4 * self.H,))
        self.b_hh = u(keys[3], (4 * self.H,))

        # Pre-pad each gate block of H -> Hp so [i,f,g,o] slices stay aligned;
        # pre-transpose so the kernel/XLA matmuls are (row) @ (in, 4Hp).
        H, Hp, I = self.H, self.Hp, self.I
        wih4 = jnp.pad(self.W_ih.reshape(4, H, I), ((0, 0), (0, Hp - H), (0, 0)))
        whh4 = jnp.pad(self.W_hh.reshape(4, H, H),
                       ((0, 0), (0, Hp - H), (0, Hp - H)))
        b4 = jnp.pad((self.b_ih + self.b_hh).reshape(4, H), ((0, 0), (0, Hp - H)))
        self.wih_pad_t = wih4.reshape(4 * Hp, I).T                      # (I, 4Hp) f32
        self.whh_pad_t = whh4.reshape(4 * Hp, Hp).T.astype(matmul_dtype)  # (Hp, 4Hp)
        self.bias_pad = b4.reshape(1, 1, 4 * Hp)                        # (1,1,4Hp) f32

    def forward(self, hidden, packed_data, batch_sizes):
        """hidden = (h0, c0), each (1, B, H); packed_data (sum(bs), I);
        batch_sizes: non-increasing list of Python ints (PackedSequence)."""
        h0, c0 = hidden
        h0 = h0[0]
        c0 = c0[0]
        H, Hp, I = self.H, self.Hp, self.I
        B = int(batch_sizes[0])
        T = len(batch_sizes)

        # Padded batch; split into 2 "parallel" blocks when large enough (v7x).
        Bp = _round_up(B, 8)
        if Bp >= 16:
            Bp = _round_up(Bp, 16)
            batch_block = Bp // 2
        else:
            batch_block = Bp
        Tc = min(8, T)
        Tp = _round_up(T, Tc)

        # --- glue: pad packed data to (Tp, Bp, I) with ONE scatter ---
        bs_list = [int(b) for b in batch_sizes]
        t_idx = jnp.asarray(np.repeat(np.arange(T), bs_list), jnp.int32)
        b_idx = jnp.asarray(np.concatenate([np.arange(b) for b in bs_list]),
                            jnp.int32)
        padded_x = jnp.zeros((Tp, Bp, I), packed_data.dtype
                             ).at[t_idx, b_idx].set(packed_data)

        # Hoisted input projection: one big GEMM (+ bias) outside the recurrence.
        gx = (jnp.dot(padded_x.reshape(Tp * Bp, I).astype(jnp.float32),
                      self.wih_pad_t, preferred_element_type=jnp.float32)
              .reshape(Tp, Bp, 4 * Hp) + self.bias_pad)

        h0p = jnp.zeros((Bp, Hp), jnp.float32).at[:B, :H].set(
            h0.astype(jnp.float32))
        c0p = jnp.zeros((Bp, Hp), jnp.float32).at[:B, :H].set(
            c0.astype(jnp.float32))

        bs_pad = bs_list + [0] * (Tp - T)

        y_pad, hTp, cTp = lstm_recurrence_pallas(
            gx, h0p, c0p, self.whh_pad_t, bs_pad,
            time_chunk=Tc, batch_block=batch_block,
            out_dtype=packed_data.dtype)

        # --- glue: re-pack output with ONE gather ---
        out_packed = y_pad[t_idx, b_idx][:, :H]
        hT = hTp[:B, :H]
        cT = cTp[:B, :H]
        return (out_packed, batch_sizes), (hT[None], cT[None])


def _reference(padded_x, batch_sizes, h0, c0, W_ih, W_hh, b_ih, b_hh):
    H = h0.shape[-1]
    bs = jnp.asarray(batch_sizes, jnp.int32)

    def step(carry, inp):
        h, c = carry
        x_t, bsz = inp
        gates = x_t @ W_ih.T + b_ih + h @ W_hh.T + b_hh
        i = jax.nn.sigmoid(gates[:, :H])
        f = jax.nn.sigmoid(gates[:, H:2 * H])
        g = jnp.tanh(gates[:, 2 * H:3 * H])
        o = jax.nn.sigmoid(gates[:, 3 * H:])
        c_new = f * c + i * g
        h_new = o * jnp.tanh(c_new)
        active = (jnp.arange(h.shape[0]) < bsz)[:, None]
        h_new = jnp.where(active, h_new, h)
        c_new = jnp.where(active, c_new, c)
        return (h_new, c_new), h_new

    (hT, cT), ys = jax.lax.scan(step, (h0, c0), (padded_x, bs))
    return ys, hT, cT


if __name__ == "__main__":
    I, H = 16, 32
    lengths = [8, 7, 5, 3]                # variable-length sequences
    B = len(lengths)
    T = max(lengths)
    batch_sizes = [sum(1 for L in lengths if L > t) for t in range(T)]  # [4,4,4,3,3,2,2,1]
    N = sum(batch_sizes)

    root = jax.random.PRNGKey(0)
    k_mod, k_x, k_h, k_c = jax.random.split(root, 4)

    model = WrappedLSTMPallas(I, H, num_layers=1, key=k_mod)

    packed_data = jax.random.normal(k_x, (N, I), jnp.float32)
    h0 = jax.random.normal(k_h, (1, B, H), jnp.float32)
    c0 = jax.random.normal(k_c, (1, B, H), jnp.float32)

    (out_packed, out_bs), (hT, cT) = model.forward((h0, c0), packed_data, batch_sizes)
    out_packed, hT, cT = jax.block_until_ready((out_packed, hT, cT))

    # sanity check against a pure-f32 JAX reference of the same packed-LSTM math
    # (kernel uses bf16 operands for the recurrence matmul -> looser tolerance)
    offsets = np.cumsum([0] + batch_sizes)
    padded = jnp.zeros((T, B, I), jnp.float32)
    for t, bsz in enumerate(batch_sizes):
        padded = padded.at[t, :bsz].set(packed_data[offsets[t]:offsets[t + 1]])
    ys_ref, hT_ref, cT_ref = _reference(
        padded, batch_sizes, h0[0], c0[0],
        model.W_ih, model.W_hh, model.b_ih, model.b_hh)
    out_ref = jnp.concatenate([ys_ref[t, :batch_sizes[t]] for t in range(T)], axis=0)

    np.testing.assert_allclose(np.asarray(out_packed), np.asarray(out_ref),
                               rtol=2e-2, atol=2e-2)
    np.testing.assert_allclose(np.asarray(hT[0]), np.asarray(hT_ref),
                               rtol=2e-2, atol=2e-2)
    np.testing.assert_allclose(np.asarray(cT[0]), np.asarray(cT_ref),
                               rtol=2e-2, atol=2e-2)

    print("KERNEL_OK")
</pallas_src>

<mosaic_0001>
module attributes {stable_mosaic.version = 11 : i64} {
  func.func @_lstm_recurrence_kernel(%arg0: i32, %arg1: i32, %arg2: memref<8xi32, #tpu.memory_space<smem>>, %arg3: memref<8x8x512xf32, #tpu.memory_space<vmem>>, %arg4: memref<8x128xf32, #tpu.memory_space<vmem>>, %arg5: memref<8x128xf32, #tpu.memory_space<vmem>>, %arg6: memref<128x512xbf16, #tpu.memory_space<vmem>>, %arg7: memref<8x8x128xf32, #tpu.memory_space<vmem>>, %arg8: memref<8x128xf32, #tpu.memory_space<vmem>>, %arg9: memref<8x128xf32, #tpu.memory_space<vmem>>, %arg10: memref<8x128xf32, #tpu.memory_space<vmem>>, %arg11: memref<8x128xf32, #tpu.memory_space<vmem>>) attributes {dimension_semantics = [#tpu.dimension_semantics<parallel>, #tpu.dimension_semantics<arbitrary>], iteration_bounds = array<i64: 1, 1>, scalar_prefetch = 1 : i64, scratch_operands = 2 : i64, tpu.core_type = #tpu.core_type<tc>, window_params = [{transform_indices = @transform_0, window_bounds = array<i64: 8, 8, 512>}, {transform_indices = @transform_1, window_bounds = array<i64: 8, 128>}, {transform_indices = @transform_2, window_bounds = array<i64: 8, 128>}, {pipeline_mode = #tpu.pipeline_mode<synchronous>, transform_indices = @transform_3, window_bounds = array<i64: 128, 512>}, {transform_indices = @transform_4, window_bounds = array<i64: 8, 8, 128>}, {transform_indices = @transform_5, window_bounds = array<i64: 8, 128>}, {transform_indices = @transform_6, window_bounds = array<i64: 8, 128>}]} {
    %c0_i32 = arith.constant 0 : i32
    %0 = arith.cmpi eq, %arg1, %c0_i32 : i32
    %1 = arith.extui %0 : i1 to i32
    %c0_i32_0 = arith.constant 0 : i32
    %2 = arith.cmpi ne, %1, %c0_i32_0 : i32
    scf.if %2 {
      %c0_141 = arith.constant 0 : index
      %c0_142 = arith.constant 0 : index
      %387 = vector.load %arg4[%c0_141, %c0_142] : memref<8x128xf32, #tpu.memory_space<vmem>>, vector<8x128xf32>
      %c0_143 = arith.constant 0 : index
      %c0_144 = arith.constant 0 : index
      %388 = vector.load %arg10[%c0_143, %c0_144] : memref<8x128xf32, #tpu.memory_space<vmem>>, vector<8x128xf32>
      tpu.vector_store %arg10[%c0_143, %c0_144], %387 {strides = array<i32>} : memref<8x128xf32, #tpu.memory_space<vmem>>, vector<8x128xf32>,
      %c0_145 = arith.constant 0 : index
      %c0_146 = arith.constant 0 : index
      %389 = vector.load %arg5[%c0_145, %c0_146] : memref<8x128xf32, #tpu.memory_space<vmem>>, vector<8x128xf32>
      %c0_147 = arith.constant 0 : index
      %c0_148 = arith.constant 0 : index
      %390 = vector.load %arg11[%c0_147, %c0_148] : memref<8x128xf32, #tpu.memory_space<vmem>>, vector<8x128xf32>
      tpu.vector_store %arg11[%c0_147, %c0_148], %389 {strides = array<i32>} : memref<8x128xf32, #tpu.memory_space<vmem>>, vector<8x128xf32>,
    } else {
    }
    %c0 = arith.constant 0 : index
    %c0_1 = arith.constant 0 : index
    %3 = vector.load %arg6[%c0, %c0_1] : memref<128x512xbf16, #tpu.memory_space<vmem>>, vector<128x512xbf16>
    %4 = tpu.iota {dimensions = array<i32: 0>} : vector<8x128xi32>
    %c8_i32 = arith.constant 8 : i32
    %5 = arith.muli %arg0, %c8_i32 : i32
    %6 = vector.broadcast %5 : i32 to vector<8x128xi32>
    %7 = arith.addi %4, %6 : vector<8x128xi32>
    %c0_i32_2 = arith.constant 0 : i32
    %c8_i32_3 = arith.constant 8 : i32
    %8 = arith.muli %arg1, %c8_i32_3 : i32
    %9 = arith.addi %8, %c0_i32_2 : i32
    %c0_4 = arith.constant 0 : index
    %c0_5 = arith.constant 0 : index
    %10 = vector.load %arg10[%c0_4, %c0_5] : memref<8x128xf32, #tpu.memory_space<vmem>>, vector<8x128xf32>
    %c0_6 = arith.constant 0 : index
    %c0_7 = arith.constant 0 : index
    %11 = vector.load %arg11[%c0_6, %c0_7] : memref<8x128xf32, #tpu.memory_space<vmem>>, vector<8x128xf32>
    %12 = arith.index_cast %c0_i32_2 : i32 to index
    %c0_8 = arith.constant 0 : index
    %c0_9 = arith.constant 0 : index
    %13 = vector.load %arg3[%12, %c0_8, %c0_9] : memref<8x8x512xf32, #tpu.memory_space<vmem>>, vector<1x8x512xf32>
    %14 = vector.shape_cast %13 : vector<1x8x512xf32> to vector<8x512xf32>
    %15 = arith.truncf %10 : vector<8x128xf32> to vector<8x128xbf16>
    %cst = arith.constant dense<0.000000e+00> : vector<8x512xf32>
    %16 = tpu.matmul %15, %3, %cst {dimension_numbers = #tpu.dot_dimension_numbers<[1], [0], [0], [1], [0, 0, 1, 1], [], []>} : vector<8x128xbf16>, vector<128x512xbf16>, vector<8x512xf32> -> vector<8x512xf32>
    %17 = arith.addf %14, %16 : vector<8x512xf32>
    %18 = vector.extract_strided_slice %17 {offsets = [0, 0], sizes = [8, 128], strides = [1, 1]} : vector<8x512xf32> to vector<8x128xf32>
    %19 = arith.negf %18 : vector<8x128xf32>
    %20 = math.exp %19 : vector<8x128xf32>
    %cst_10 = arith.constant 1.000000e+00 : f32
    %21 = vector.broadcast %cst_10 : f32 to vector<8x128xf32>
    %22 = arith.addf %21, %20 : vector<8x128xf32>
    %23 = arith.divf %21, %22 : vector<8x128xf32>
    %24 = vector.extract_strided_slice %17 {offsets = [0, 128], sizes = [8, 128], strides = [1, 1]} : vector<8x512xf32> to vector<8x128xf32>
    %25 = arith.negf %24 : vector<8x128xf32>
    %26 = math.exp %25 : vector<8x128xf32>
    %cst_11 = arith.constant 1.000000e+00 : f32
    %27 = vector.broadcast %cst_11 : f32 to vector<8x128xf32>
    %28 = arith.addf %27, %26 : vector<8x128xf32>
    %29 = arith.divf %27, %28 : vector<8x128xf32>
    %30 = vector.extract_strided_slice %17 {offsets = [0, 256], sizes = [8, 128], strides = [1, 1]} : vector<8x512xf32> to vector<8x128xf32>
    %31 = math.tanh %30 : vector<8x128xf32>
    %32 = vector.extract_strided_slice %17 {offsets = [0, 384], sizes = [8, 128], strides = [1, 1]} : vector<8x512xf32> to vector<8x128xf32>
    %33 = arith.negf %32 : vector<8x128xf32>
    %34 = math.exp %33 : vector<8x128xf32>
    %cst_12 = arith.constant 1.000000e+00 : f32
    %35 = vector.broadcast %cst_12 : f32 to vector<8x128xf32>
    %36 = arith.addf %35, %34 : vector<8x128xf32>
    %37 = arith.divf %35, %36 : vector<8x128xf32>
    %38 = arith.mulf %29, %11 : vector<8x128xf32>
    %39 = arith.mulf %23, %31 : vector<8x128xf32>
    %40 = arith.addf %38, %39 : vector<8x128xf32>
    %41 = math.tanh %40 : vector<8x128xf32>
    %42 = arith.mulf %37, %41 : vector<8x128xf32>
    %43 = arith.index_cast %9 : i32 to index
    %44 = memref.load %arg2[%43] : memref<8xi32, #tpu.memory_space<smem>>
    %45 = vector.broadcast %44 : i32 to vector<8x128xi32>
    %46 = arith.cmpi slt, %7, %45 : vector<8x128xi32>
    %47 = arith.select %46, %42, %10 : vector<8x128xi1>, vector<8x128xf32>
    %48 = arith.select %46, %40, %11 : vector<8x128xi1>, vector<8x128xf32>
    %c0_13 = arith.constant 0 : index
    %c0_14 = arith.constant 0 : index
    %49 = vector.load %arg10[%c0_13, %c0_14] : memref<8x128xf32, #tpu.memory_space<vmem>>, vector<8x128xf32>
    tpu.vector_store %arg10[%c0_13, %c0_14], %47 {strides = array<i32>} : memref<8x128xf32, #tpu.memory_space<vmem>>, vector<8x128xf32>,
    %c0_15 = arith.constant 0 : index
    %c0_16 = arith.constant 0 : index
    %50 = vector.load %arg11[%c0_15, %c0_16] : memref<8x128xf32, #tpu.memory_space<vmem>>, vector<8x128xf32>
    tpu.vector_store %arg11[%c0_15, %c0_16], %48 {strides = array<i32>} : memref<8x128xf32, #tpu.memory_space<vmem>>, vector<8x128xf32>,
    %51 = arith.index_cast %c0_i32_2 : i32 to index
    %c0_17 = arith.constant 0 : index
    %c0_18 = arith.constant 0 : index
    %52 = vector.load %arg7[%51, %c0_17, %c0_18] : memref<8x8x128xf32, #tpu.memory_space<vmem>>, vector<1x8x128xf32>
    %53 = vector.shape_cast %52 : vector<1x8x128xf32> to vector<8x128xf32>
    %54 = vector.shape_cast %47 : vector<8x128xf32> to vector<1x8x128xf32>
    tpu.vector_store %arg7[%51, %c0_17, %c0_18], %54 {strides = array<i32>} : memref<8x8x128xf32, #tpu.memory_space<vmem>>, vector<1x8x128xf32>,
    %c1_i32 = arith.constant 1 : i32
    %c8_i32_19 = arith.constant 8 : i32
    %55 = arith.muli %arg1, %c8_i32_19 : i32
    %56 = arith.addi %55, %c1_i32 : i32
    %c0_20 = arith.constant 0 : index
    %c0_21 = arith.constant 0 : index
    %57 = vector.load %arg10[%c0_20, %c0_21] : memref<8x128xf32, #tpu.memory_space<vmem>>, vector<8x128xf32>
    %c0_22 = arith.constant 0 : index
    %c0_23 = arith.constant 0 : index
    %58 = vector.load %arg11[%c0_22, %c0_23] : memref<8x128xf32, #tpu.memory_space<vmem>>, vector<8x128xf32>
    %59 = arith.index_cast %c1_i32 : i32 to index
    %c0_24 = arith.constant 0 : index
    %c0_25 = arith.constant 0 : index
    %60 = vector.load %arg3[%59, %c0_24, %c0_25] : memref<8x8x512xf32, #tpu.memory_space<vmem>>, vector<1x8x512xf32>
    %61 = vector.shape_cast %60 : vector<1x8x512xf32> to vector<8x512xf32>
    %62 = arith.truncf %57 : vector<8x128xf32> to vector<8x128xbf16>
    %cst_26 = arith.constant dense<0.000000e+00> : vector<8x512xf32>
    %63 = tpu.matmul %62, %3, %cst_26 {dimension_numbers = #tpu.dot_dimension_numbers<[1], [0], [0], [1], [0, 0, 1, 1], [], []>} : vector<8x128xbf16>, vector<128x512xbf16>, vector<8x512xf32> -> vector<8x512xf32>
    %64 = arith.addf %61, %63 : vector<8x512xf32>
    %65 = vector.extract_strided_slice %64 {offsets = [0, 0], sizes = [8, 128], strides = [1, 1]} : vector<8x512xf32> to vector<8x128xf32>
    %66 = arith.negf %65 : vector<8x128xf32>
    %67 = math.exp %66 : vector<8x128xf32>
    %cst_27 = arith.constant 1.000000e+00 : f32
    %68 = vector.broadcast %cst_27 : f32 to vector<8x128xf32>
    %69 = arith.addf %68, %67 : vector<8x128xf32>
    %70 = arith.divf %68, %69 : vector<8x128xf32>
    %71 = vector.extract_strided_slice %64 {offsets = [0, 128], sizes = [8, 128], strides = [1, 1]} : vector<8x512xf32> to vector<8x128xf32>
    %72 = arith.negf %71 : vector<8x128xf32>
    %73 = math.exp %72 : vector<8x128xf32>
    %cst_28 = arith.constant 1.000000e+00 : f32
    %74 = vector.broadcast %cst_28 : f32 to vector<8x128xf32>
    %75 = arith.addf %74, %73 : vector<8x128xf32>
    %76 = arith.divf %74, %75 : vector<8x128xf32>
    %77 = vector.extract_strided_slice %64 {offsets = [0, 256], sizes = [8, 128], strides = [1, 1]} : vector<8x512xf32> to vector<8x128xf32>
    %78 = math.tanh %77 : vector<8x128xf32>
    %79 = vector.extract_strided_slice %64 {offsets = [0, 384], sizes = [8, 128], strides = [1, 1]} : vector<8x512xf32> to vector<8x128xf32>
    %80 = arith.negf %79 : vector<8x128xf32>
    %81 = math.exp %80 : vector<8x128xf32>
    %cst_29 = arith.constant 1.000000e+00 : f32
    %82 = vector.broadcast %cst_29 : f32 to vector<8x128xf32>
    %83 = arith.addf %82, %81 : vector<8x128xf32>
    %84 = arith.divf %82, %83 : vector<8x128xf32>
    %85 = arith.mulf %76, %58 : vector<8x128xf32>
    %86 = arith.mulf %70, %78 : vector<8x128xf32>
    %87 = arith.addf %85, %86 : vector<8x128xf32>
    %88 = math.tanh %87 : vector<8x128xf32>
    %89 = arith.mulf %84, %88 : vector<8x128xf32>
    %90 = arith.index_cast %56 : i32 to index
    %91 = memref.load %arg2[%90] : memref<8xi32, #tpu.memory_space<smem>>
    %92 = vector.broadcast %91 : i32 to vector<8x128xi32>
    %93 = arith.cmpi slt, %7, %92 : vector<8x128xi32>
    %94 = arith.select %93, %89, %57 : vector<8x128xi1>, vector<8x128xf32>
    %95 = arith.select %93, %87, %58 : vector<8x128xi1>, vector<8x128xf32>
    %c0_30 = arith.constant 0 : index
    %c0_31 = arith.constant 0 : index
    %96 = vector.load %arg10[%c0_30, %c0_31] : memref<8x128xf32, #tpu.memory_space<vmem>>, vector<8x128xf32>
    tpu.vector_store %arg10[%c0_30, %c0_31], %94 {strides = array<i32>} : memref<8x128xf32, #tpu.memory_space<vmem>>, vector<8x128xf32>,
    %c0_32 = arith.constant 0 : index
    %c0_33 = arith.constant 0 : index
    %97 = vector.load %arg11[%c0_32, %c0_33] : memref<8x128xf32, #tpu.memory_space<vmem>>, vector<8x128xf32>
    tpu.vector_store %arg11[%c0_32, %c0_33], %95 {strides = array<i32>} : memref<8x128xf32, #tpu.memory_space<vmem>>, vector<8x128xf32>,
    %98 = arith.index_cast %c1_i32 : i32 to index
    %c0_34 = arith.constant 0 : index
    %c0_35 = arith.constant 0 : index
    %99 = vector.load %arg7[%98, %c0_34, %c0_35] : memref<8x8x128xf32, #tpu.memory_space<vmem>>, vector<1x8x128xf32>
    %100 = vector.shape_cast %99 : vector<1x8x128xf32> to vector<8x128xf32>
    %101 = vector.shape_cast %94 : vector<8x128xf32> to vector<1x8x128xf32>
    tpu.vector_store %arg7[%98, %c0_34, %c0_35], %101 {strides = array<i32>} : memref<8x8x128xf32, #tpu.memory_space<vmem>>, vector<1x8x128xf32>,
    %c2_i32 = arith.constant 2 : i32
    %c8_i32_36 = arith.constant 8 : i32
    %102 = arith.muli %arg1, %c8_i32_36 : i32
    %103 = arith.addi %102, %c2_i32 : i32
    %c0_37 = arith.constant 0 : index
    %c0_38 = arith.constant 0 : index
    %104 = vector.load %arg10[%c0_37, %c0_38] : memref<8x128xf32, #tpu.memory_space<vmem>>, vector<8x128xf32>
    %c0_39 = arith.constant 0 : index
    %c0_40 = arith.constant 0 : index
    %105 = vector.load %arg11[%c0_39, %c0_40] : memref<8x128xf32, #tpu.memory_space<vmem>>, vector<8x128xf32>
    %106 = arith.index_cast %c2_i32 : i32 to index
    %c0_41 = arith.constant 0 : index
    %c0_42 = arith.constant 0 : index
    %107 = vector.load %arg3[%106, %c0_41, %c0_42] : memref<8x8x512xf32, #tpu.memory_space<vmem>>, vector<1x8x512xf32>
    %108 = vector.shape_cast %107 : vector<1x8x512xf32> to vector<8x512xf32>
    %109 = arith.truncf %104 : vector<8x128xf32> to vector<8x128xbf16>
    %cst_43 = arith.constant dense<0.000000e+00> : vector<8x512xf32>
    %110 = tpu.matmul %109, %3, %cst_43 {dimension_numbers = #tpu.dot_dimension_numbers<[1], [0], [0], [1], [0, 0, 1, 1], [], []>} : vector<8x128xbf16>, vector<128x512xbf16>, vector<8x512xf32> -> vector<8x512xf32>
    %111 = arith.addf %108, %110 : vector<8x512xf32>
    %112 = vector.extract_strided_slice %111 {offsets = [0, 0], sizes = [8, 128], strides = [1, 1]} : vector<8x512xf32> to vector<8x128xf32>
    %113 = arith.negf %112 : vector<8x128xf32>
    %114 = math.exp %113 : vector<8x128xf32>
    %cst_44 = arith.constant 1.000000e+00 : f32
    %115 = vector.broadcast %cst_44 : f32 to vector<8x128xf32>
    %116 = arith.addf %115, %114 : vector<8x128xf32>
    %117 = arith.divf %115, %116 : vector<8x128xf32>
    %118 = vector.extract_strided_slice %111 {offsets = [0, 128], sizes = [8, 128], strides = [1, 1]} : vector<8x512xf32> to vector<8x128xf32>
    %119 = arith.negf %118 : vector<8x128xf32>
    %120 = math.exp %119 : vector<8x128xf32>
    %cst_45 = arith.constant 1.000000e+00 : f32
    %121 = vector.broadcast %cst_45 : f32 to vector<8x128xf32>
    %122 = arith.addf %121, %120 : vector<8x128xf32>
    %123 = arith.divf %121, %122 : vector<8x128xf32>
    %124 = vector.extract_strided_slice %111 {offsets = [0, 256], sizes = [8, 128], strides = [1, 1]} : vector<8x512xf32> to vector<8x128xf32>
    %125 = math.tanh %124 : vector<8x128xf32>
    %126 = vector.extract_strided_slice %111 {offsets = [0, 384], sizes = [8, 128], strides = [1, 1]} : vector<8x512xf32> to vector<8x128xf32>
    %127 = arith.negf %126 : vector<8x128xf32>
    %128 = math.exp %127 : vector<8x128xf32>
    %cst_46 = arith.constant 1.000000e+00 : f32
    %129 = vector.broadcast %cst_46 : f32 to vector<8x128xf32>
    %130 = arith.addf %129, %128 : vector<8x128xf32>
    %131 = arith.divf %129, %130 : vector<8x128xf32>
    %132 = arith.mulf %123, %105 : vector<8x128xf32>
    %133 = arith.mulf %117, %125 : vector<8x128xf32>
    %134 = arith.addf %132, %133 : vector<8x128xf32>
    %135 = math.tanh %134 : vector<8x128xf32>
    %136 = arith.mulf %131, %135 : vector<8x128xf32>
    %137 = arith.index_cast %103 : i32 to index
    %138 = memref.load %arg2[%137] : memref<8xi32, #tpu.memory_space<smem>>
    %139 = vector.broadcast %138 : i32 to vector<8x128xi32>
    %140 = arith.cmpi slt, %7, %139 : vector<8x128xi32>
    %141 = arith.select %140, %136, %104 : vector<8x128xi1>, vector<8x128xf32>
    %142 = arith.select %140, %134, %105 : vector<8x128xi1>, vector<8x128xf32>
    %c0_47 = arith.constant 0 : index
    %c0_48 = arith.constant 0 : index
    %143 = vector.load %arg10[%c0_47, %c0_48] : memref<8x128xf32, #tpu.memory_space<vmem>>, vector<8x128xf32>
    tpu.vector_store %arg10[%c0_47, %c0_48], %141 {strides = array<i32>} : memref<8x128xf32, #tpu.memory_space<vmem>>, vector<8x128xf32>,
    %c0_49 = arith.constant 0 : index
    %c0_50 = arith.constant 0 : index
    %144 = vector.load %arg11[%c0_49, %c0_50] : memref<8x128xf32, #tpu.memory_space<vmem>>, vector<8x128xf32>
    tpu.vector_store %arg11[%c0_49, %c0_50], %142 {strides = array<i32>} : memref<8x128xf32, #tpu.memory_space<vmem>>, vector<8x128xf32>,
    %145 = arith.index_cast %c2_i32 : i32 to index
    %c0_51 = arith.constant 0 : index
    %c0_52 = arith.constant 0 : index
    %146 = vector.load %arg7[%145, %c0_51, %c0_52] : memref<8x8x128xf32, #tpu.memory_space<vmem>>, vector<1x8x128xf32>
    %147 = vector.shape_cast %146 : vector<1x8x128xf32> to vector<8x128xf32>
    %148 = vector.shape_cast %141 : vector<8x128xf32> to vector<1x8x128xf32>
    tpu.vector_store %arg7[%145, %c0_51, %c0_52], %148 {strides = array<i32>} : memref<8x8x128xf32, #tpu.memory_space<vmem>>, vector<1x8x128xf32>,
    %c3_i32 = arith.constant 3 : i32
    %c8_i32_53 = arith.constant 8 : i32
    %149 = arith.muli %arg1, %c8_i32_53 : i32
    %150 = arith.addi %149, %c3_i32 : i32
    %c0_54 = arith.constant 0 : index
    %c0_55 = arith.constant 0 : index
    %151 = vector.load %arg10[%c0_54, %c0_55] : memref<8x128xf32, #tpu.memory_space<vmem>>, vector<8x128xf32>
    %c0_56 = arith.constant 0 : index
    %c0_57 = arith.constant 0 : index
    %152 = vector.load %arg11[%c0_56, %c0_57] : memref<8x128xf32, #tpu.memory_space<vmem>>, vector<8x128xf32>
    %153 = arith.index_cast %c3_i32 : i32 to index
    %c0_58 = arith.constant 0 : index
    %c0_59 = arith.constant 0 : index
    %154 = vector.load %arg3[%153, %c0_58, %c0_59] : memref<8x8x512xf32, #tpu.memory_space<vmem>>, vector<1x8x512xf32>
    %155 = vector.shape_cast %154 : vector<1x8x512xf32> to vector<8x512xf32>
    %156 = arith.truncf %151 : vector<8x128xf32> to vector<8x128xbf16>
    %cst_60 = arith.constant dense<0.000000e+00> : vector<8x512xf32>
    %157 = tpu.matmul %156, %3, %cst_60 {dimension_numbers = #tpu.dot_dimension_numbers<[1], [0], [0], [1], [0, 0, 1, 1], [], []>} : vector<8x128xbf16>, vector<128x512xbf16>, vector<8x512xf32> -> vector<8x512xf32>
    %158 = arith.addf %155, %157 : vector<8x512xf32>
    %159 = vector.extract_strided_slice %158 {offsets = [0, 0], sizes = [8, 128], strides = [1, 1]} : vector<8x512xf32> to vector<8x128xf32>
    %160 = arith.negf %159 : vector<8x128xf32>
    %161 = math.exp %160 : vector<8x128xf32>
    %cst_61 = arith.constant 1.000000e+00 : f32
    %162 = vector.broadcast %cst_61 : f32 to vector<8x128xf32>
    %163 = arith.addf %162, %161 : vector<8x128xf32>
    %164 = arith.divf %162, %163 : vector<8x128xf32>
    %165 = vector.extract_strided_slice %158 {offsets = [0, 128], sizes = [8, 128], strides = [1, 1]} : vector<8x512xf32> to vector<8x128xf32>
    %166 = arith.negf %165 : vector<8x128xf32>
    %167 = math.exp %166 : vector<8x128xf32>
    %cst_62 = arith.constant 1.000000e+00 : f32
    %168 = vector.broadcast %cst_62 : f32 to vector<8x128xf32>
    %169 = arith.addf %168, %167 : vector<8x128xf32>
    %170 = arith.divf %168, %169 : vector<8x128xf32>
    %171 = vector.extract_strided_slice %158 {offsets = [0, 256], sizes = [8, 128], strides = [1, 1]} : vector<8x512xf32> to vector<8x128xf32>
    %172 = math.tanh %171 : vector<8x128xf32>
    %173 = vector.extract_strided_slice %158 {offsets = [0, 384], sizes = [8, 128], strides = [1, 1]} : vector<8x512xf32> to vector<8x128xf32>
    %174 = arith.negf %173 : vector<8x128xf32>
    %175 = math.exp %174 : vector<8x128xf32>
    %cst_63 = arith.constant 1.000000e+00 : f32
    %176 = vector.broadcast %cst_63 : f32 to vector<8x128xf32>
    %177 = arith.addf %176, %175 : vector<8x128xf32>
    %178 = arith.divf %176, %177 : vector<8x128xf32>
    %179 = arith.mulf %170, %152 : vector<8x128xf32>
    %180 = arith.mulf %164, %172 : vector<8x128xf32>
    %181 = arith.addf %179, %180 : vector<8x128xf32>
    %182 = math.tanh %181 : vector<8x128xf32>
    %183 = arith.mulf %178, %182 : vector<8x128xf32>
    %184 = arith.index_cast %150 : i32 to index
    %185 = memref.load %arg2[%184] : memref<8xi32, #tpu.memory_space<smem>>
    %186 = vector.broadcast %185 : i32 to vector<8x128xi32>
    %187 = arith.cmpi slt, %7, %186 : vector<8x128xi32>
    %188 = arith.select %187, %183, %151 : vector<8x128xi1>, vector<8x128xf32>
    %189 = arith.select %187, %181, %152 : vector<8x128xi1>, vector<8x128xf32>
    %c0_64 = arith.constant 0 : index
    %c0_65 = arith.constant 0 : index
    %190 = vector.load %arg10[%c0_64, %c0_65] : memref<8x128xf32, #tpu.memory_space<vmem>>, vector<8x128xf32>
    tpu.vector_store %arg10[%c0_64, %c0_65], %188 {strides = array<i32>} : memref<8x128xf32, #tpu.memory_space<vmem>>, vector<8x128xf32>,
    %c0_66 = arith.constant 0 : index
    %c0_67 = arith.constant 0 : index
    %191 = vector.load %arg11[%c0_66, %c0_67] : memref<8x128xf32, #tpu.memory_space<vmem>>, vector<8x128xf32>
    tpu.vector_store %arg11[%c0_66, %c0_67], %189 {strides = array<i32>} : memref<8x128xf32, #tpu.memory_space<vmem>>, vector<8x128xf32>,
    %192 = arith.index_cast %c3_i32 : i32 to index
    %c0_68 = arith.constant 0 : index
    %c0_69 = arith.constant 0 : index
    %193 = vector.load %arg7[%192, %c0_68, %c0_69] : memref<8x8x128xf32, #tpu.memory_space<vmem>>, vector<1x8x128xf32>
    %194 = vector.shape_cast %193 : vector<1x8x128xf32> to vector<8x128xf32>
    %195 = vector.shape_cast %188 : vector<8x128xf32> to vector<1x8x128xf32>
    tpu.vector_store %arg7[%192, %c0_68, %c0_69], %195 {strides = array<i32>} : memref<8x8x128xf32, #tpu.memory_space<vmem>>, vector<1x8x128xf32>,
    %c4_i32 = arith.constant 4 : i32
    %c8_i32_70 = arith.constant 8 : i32
    %196 = arith.muli %arg1, %c8_i32_70 : i32
    %197 = arith.addi %196, %c4_i32 : i32
    %c0_71 = arith.constant 0 : index
    %c0_72 = arith.constant 0 : index
    %198 = vector.load %arg10[%c0_71, %c0_72] : memref<8x128xf32, #tpu.memory_space<vmem>>, vector<8x128xf32>
    %c0_73 = arith.constant 0 : index
    %c0_74 = arith.constant 0 : index
    %199 = vector.load %arg11[%c0_73, %c0_74] : memref<8x128xf32, #tpu.memory_space<vmem>>, vector<8x128xf32>
    %200 = arith.index_cast %c4_i32 : i32 to index
    %c0_75 = arith.constant 0 : index
    %c0_76 = arith.constant 0 : index
    %201 = vector.load %arg3[%200, %c0_75, %c0_76] : memref<8x8x512xf32, #tpu.memory_space<vmem>>, vector<1x8x512xf32>
    %202 = vector.shape_cast %201 : vector<1x8x512xf32> to vector<8x512xf32>
    %203 = arith.truncf %198 : vector<8x128xf32> to vector<8x128xbf16>
    %cst_77 = arith.constant dense<0.000000e+00> : vector<8x512xf32>
    %204 = tpu.matmul %203, %3, %cst_77 {dimension_numbers = #tpu.dot_dimension_numbers<[1], [0], [0], [1], [0, 0, 1, 1], [], []>} : vector<8x128xbf16>, vector<128x512xbf16>, vector<8x512xf32> -> vector<8x512xf32>
    %205 = arith.addf %202, %204 : vector<8x512xf32>
    %206 = vector.extract_strided_slice %205 {offsets = [0, 0], sizes = [8, 128], strides = [1, 1]} : vector<8x512xf32> to vector<8x128xf32>
    %207 = arith.negf %206 : vector<8x128xf32>
    %208 = math.exp %207 : vector<8x128xf32>
    %cst_78 = arith.constant 1.000000e+00 : f32
    %209 = vector.broadcast %cst_78 : f32 to vector<8x128xf32>
    %210 = arith.addf %209, %208 : vector<8x128xf32>
    %211 = arith.divf %209, %210 : vector<8x128xf32>
    %212 = vector.extract_strided_slice %205 {offsets = [0, 128], sizes = [8, 128], strides = [1, 1]} : vector<8x512xf32> to vector<8x128xf32>
    %213 = arith.negf %212 : vector<8x128xf32>
    %214 = math.exp %213 : vector<8x128xf32>
    %cst_79 = arith.constant 1.000000e+00 : f32
    %215 = vector.broadcast %cst_79 : f32 to vector<8x128xf32>
    %216 = arith.addf %215, %214 : vector<8x128xf32>
    %217 = arith.divf %215, %216 : vector<8x128xf32>
    %218 = vector.extract_strided_slice %205 {offsets = [0, 256], sizes = [8, 128], strides = [1, 1]} : vector<8x512xf32> to vector<8x128xf32>
    %219 = math.tanh %218 : vector<8x128xf32>
    %220 = vector.extract_strided_slice %205 {offsets = [0, 384], sizes = [8, 128], strides = [1, 1]} : vector<8x512xf32> to vector<8x128xf32>
    %221 = arith.negf %220 : vector<8x128xf32>
    %222 = math.exp %221 : vector<8x128xf32>
    %cst_80 = arith.constant 1.000000e+00 : f32
    %223 = vector.broadcast %cst_80 : f32 to vector<8x128xf32>
    %224 = arith.addf %223, %222 : vector<8x128xf32>
    %225 = arith.divf %223, %224 : vector<8x128xf32>
    %226 = arith.mulf %217, %199 : vector<8x128xf32>
    %227 = arith.mulf %211, %219 : vector<8x128xf32>
    %228 = arith.addf %226, %227 : vector<8x128xf32>
    %229 = math.tanh %228 : vector<8x128xf32>
    %230 = arith.mulf %225, %229 : vector<8x128xf32>
    %231 = arith.index_cast %197 : i32 to index
    %232 = memref.load %arg2[%231] : memref<8xi32, #tpu.memory_space<smem>>
    %233 = vector.broadcast %232 : i32 to vector<8x128xi32>
    %234 = arith.cmpi slt, %7, %233 : vector<8x128xi32>
    %235 = arith.select %234, %230, %198 : vector<8x128xi1>, vector<8x128xf32>
    %236 = arith.select %234, %228, %199 : vector<8x128xi1>, vector<8x128xf32>
    %c0_81 = arith.constant 0 : index
    %c0_82 = arith.constant 0 : index
    %237 = vector.load %arg10[%c0_81, %c0_82] : memref<8x128xf32, #tpu.memory_space<vmem>>, vector<8x128xf32>
    tpu.vector_store %arg10[%c0_81, %c0_82], %235 {strides = array<i32>} : memref<8x128xf32, #tpu.memory_space<vmem>>, vector<8x128xf32>,
    %c0_83 = arith.constant 0 : index
    %c0_84 = arith.constant 0 : index
    %238 = vector.load %arg11[%c0_83, %c0_84] : memref<8x128xf32, #tpu.memory_space<vmem>>, vector<8x128xf32>
    tpu.vector_store %arg11[%c0_83, %c0_84], %236 {strides = array<i32>} : memref<8x128xf32, #tpu.memory_space<vmem>>, vector<8x128xf32>,
    %239 = arith.index_cast %c4_i32 : i32 to index
    %c0_85 = arith.constant 0 : index
    %c0_86 = arith.constant 0 : index
    %240 = vector.load %arg7[%239, %c0_85, %c0_86] : memref<8x8x128xf32, #tpu.memory_space<vmem>>, vector<1x8x128xf32>
    %241 = vector.shape_cast %240 : vector<1x8x128xf32> to vector<8x128xf32>
    %242 = vector.shape_cast %235 : vector<8x128xf32> to vector<1x8x128xf32>
    tpu.vector_store %arg7[%239, %c0_85, %c0_86], %242 {strides = array<i32>} : memref<8x8x128xf32, #tpu.memory_space<vmem>>, vector<1x8x128xf32>,
    %c5_i32 = arith.constant 5 : i32
    %c8_i32_87 = arith.constant 8 : i32
    %243 = arith.muli %arg1, %c8_i32_87 : i32
    %244 = arith.addi %243, %c5_i32 : i32
    %c0_88 = arith.constant 0 : index
    %c0_89 = arith.constant 0 : index
    %245 = vector.load %arg10[%c0_88, %c0_89] : memref<8x128xf32, #tpu.memory_space<vmem>>, vector<8x128xf32>
    %c0_90 = arith.constant 0 : index
    %c0_91 = arith.constant 0 : index
    %246 = vector.load %arg11[%c0_90, %c0_91] : memref<8x128xf32, #tpu.memory_space<vmem>>, vector<8x128xf32>
    %247 = arith.index_cast %c5_i32 : i32 to index
    %c0_92 = arith.constant 0 : index
    %c0_93 = arith.constant 0 : index
    %248 = vector.load %arg3[%247, %c0_92, %c0_93] : memref<8x8x512xf32, #tpu.memory_space<vmem>>, vector<1x8x512xf32>
    %249 = vector.shape_cast %248 : vector<1x8x512xf32> to vector<8x512xf32>
    %250 = arith.truncf %245 : vector<8x128xf32> to vector<8x128xbf16>
    %cst_94 = arith.constant dense<0.000000e+00> : vector<8x512xf32>
    %251 = tpu.matmul %250, %3, %cst_94 {dimension_numbers = #tpu.dot_dimension_numbers<[1], [0], [0], [1], [0, 0, 1, 1], [], []>} : vector<8x128xbf16>, vector<128x512xbf16>, vector<8x512xf32> -> vector<8x512xf32>
    %252 = arith.addf %249, %251 : vector<8x512xf32>
    %253 = vector.extract_strided_slice %252 {offsets = [0, 0], sizes = [8, 128], strides = [1, 1]} : vector<8x512xf32> to vector<8x128xf32>
    %254 = arith.negf %253 : vector<8x128xf32>
    %255 = math.exp %254 : vector<8x128xf32>
    %cst_95 = arith.constant 1.000000e+00 : f32
    %256 = vector.broadcast %cst_95 : f32 to vector<8x128xf32>
    %257 = arith.addf %256, %255 : vector<8x128xf32>
    %258 = arith.divf %256, %257 : vector<8x128xf32>
    %259 = vector.extract_strided_slice %252 {offsets = [0, 128], sizes = [8, 128], strides = [1, 1]} : vector<8x512xf32> to vector<8x128xf32>
    %260 = arith.negf %259 : vector<8x128xf32>
    %261 = math.exp %260 : vector<8x128xf32>
    %cst_96 = arith.constant 1.000000e+00 : f32
    %262 = vector.broadcast %cst_96 : f32 to vector<8x128xf32>
    %263 = arith.addf %262, %261 : vector<8x128xf32>
    %264 = arith.divf %262, %263 : vector<8x128xf32>
    %265 = vector.extract_strided_slice %252 {offsets = [0, 256], sizes = [8, 128], strides = [1, 1]} : vector<8x512xf32> to vector<8x128xf32>
    %266 = math.tanh %265 : vector<8x128xf32>
    %267 = vector.extract_strided_slice %252 {offsets = [0, 384], sizes = [8, 128], strides = [1, 1]} : vector<8x512xf32> to vector<8x128xf32>
    %268 = arith.negf %267 : vector<8x128xf32>
    %269 = math.exp %268 : vector<8x128xf32>
    %cst_97 = arith.constant 1.000000e+00 : f32
    %270 = vector.broadcast %cst_97 : f32 to vector<8x128xf32>
    %271 = arith.addf %270, %269 : vector<8x128xf32>
    %272 = arith.divf %270, %271 : vector<8x128xf32>
    %273 = arith.mulf %264, %246 : vector<8x128xf32>
    %274 = arith.mulf %258, %266 : vector<8x128xf32>
    %275 = arith.addf %273, %274 : vector<8x128xf32>
    %276 = math.tanh %275 : vector<8x128xf32>
    %277 = arith.mulf %272, %276 : vector<8x128xf32>
    %278 = arith.index_cast %244 : i32 to index
    %279 = memref.load %arg2[%278] : memref<8xi32, #tpu.memory_space<smem>>
    %280 = vector.broadcast %279 : i32 to vector<8x128xi32>
    %281 = arith.cmpi slt, %7, %280 : vector<8x128xi32>
    %282 = arith.select %281, %277, %245 : vector<8x128xi1>, vector<8x128xf32>
    %283 = arith.select %281, %275, %246 : vector<8x128xi1>, vector<8x128xf32>
    %c0_98 = arith.constant 0 : index
    %c0_99 = arith.constant 0 : index
    %284 = vector.load %arg10[%c0_98, %c0_99] : memref<8x128xf32, #tpu.memory_space<vmem>>, vector<8x128xf32>
    tpu.vector_store %arg10[%c0_98, %c0_99], %282 {strides = array<i32>} : memref<8x128xf32, #tpu.memory_space<vmem>>, vector<8x128xf32>,
    %c0_100 = arith.constant 0 : index
    %c0_101 = arith.constant 0 : index
    %285 = vector.load %arg11[%c0_100, %c0_101] : memref<8x128xf32, #tpu.memory_space<vmem>>, vector<8x128xf32>
    tpu.vector_store %arg11[%c0_100, %c0_101], %283 {strides = array<i32>} : memref<8x128xf32, #tpu.memory_space<vmem>>, vector<8x128xf32>,
    %286 = arith.index_cast %c5_i32 : i32 to index
    %c0_102 = arith.constant 0 : index
    %c0_103 = arith.constant 0 : index
    %287 = vector.load %arg7[%286, %c0_102, %c0_103] : memref<8x8x128xf32, #tpu.memory_space<vmem>>, vector<1x8x128xf32>
    %288 = vector.shape_cast %287 : vector<1x8x128xf32> to vector<8x128xf32>
    %289 = vector.shape_cast %282 : vector<8x128xf32> to vector<1x8x128xf32>
    tpu.vector_store %arg7[%286, %c0_102, %c0_103], %289 {strides = array<i32>} : memref<8x8x128xf32, #tpu.memory_space<vmem>>, vector<1x8x128xf32>,
    %c6_i32 = arith.constant 6 : i32
    %c8_i32_104 = arith.constant 8 : i32
    %290 = arith.muli %arg1, %c8_i32_104 : i32
    %291 = arith.addi %290, %c6_i32 : i32
    %c0_105 = arith.constant 0 : index
    %c0_106 = arith.constant 0 : index
    %292 = vector.load %arg10[%c0_105, %c0_106] : memref<8x128xf32, #tpu.memory_space<vmem>>, vector<8x128xf32>
    %c0_107 = arith.constant 0 : index
    %c0_108 = arith.constant 0 : index
    %293 = vector.load %arg11[%c0_107, %c0_108] : memref<8x128xf32, #tpu.memory_space<vmem>>, vector<8x128xf32>
    %294 = arith.index_cast %c6_i32 : i32 to index
    %c0_109 = arith.constant 0 : index
    %c0_110 = arith.constant 0 : index
    %295 = vector.load %arg3[%294, %c0_109, %c0_110] : memref<8x8x512xf32, #tpu.memory_space<vmem>>, vector<1x8x512xf32>
    %296 = vector.shape_cast %295 : vector<1x8x512xf32> to vector<8x512xf32>
    %297 = arith.truncf %292 : vector<8x128xf32> to vector<8x128xbf16>
    %cst_111 = arith.constant dense<0.000000e+00> : vector<8x512xf32>
    %298 = tpu.matmul %297, %3, %cst_111 {dimension_numbers = #tpu.dot_dimension_numbers<[1], [0], [0], [1], [0, 0, 1, 1], [], []>} : vector<8x128xbf16>, vector<128x512xbf16>, vector<8x512xf32> -> vector<8x512xf32>
    %299 = arith.addf %296, %298 : vector<8x512xf32>
    %300 = vector.extract_strided_slice %299 {offsets = [0, 0], sizes = [8, 128], strides = [1, 1]} : vector<8x512xf32> to vector<8x128xf32>
    %301 = arith.negf %300 : vector<8x128xf32>
    %302 = math.exp %301 : vector<8x128xf32>
    %cst_112 = arith.constant 1.000000e+00 : f32
    %303 = vector.broadcast %cst_112 : f32 to vector<8x128xf32>
    %304 = arith.addf %303, %302 : vector<8x128xf32>
    %305 = arith.divf %303, %304 : vector<8x128xf32>
    %306 = vector.extract_strided_slice %299 {offsets = [0, 128], sizes = [8, 128], strides = [1, 1]} : vector<8x512xf32> to vector<8x128xf32>
    %307 = arith.negf %306 : vector<8x128xf32>
    %308 = math.exp %307 : vector<8x128xf32>
    %cst_113 = arith.constant 1.000000e+00 : f32
    %309 = vector.broadcast %cst_113 : f32 to vector<8x128xf32>
    %310 = arith.addf %309, %308 : vector<8x128xf32>
    %311 = arith.divf %309, %310 : vector<8x128xf32>
    %312 = vector.extract_strided_slice %299 {offsets = [0, 256], sizes = [8, 128], strides = [1, 1]} : vector<8x512xf32> to vector<8x128xf32>
    %313 = math.tanh %312 : vector<8x128xf32>
    %314 = vector.extract_strided_slice %299 {offsets = [0, 384], sizes = [8, 128], strides = [1, 1]} : vector<8x512xf32> to vector<8x128xf32>
    %315 = arith.negf %314 : vector<8x128xf32>
    %316 = math.exp %315 : vector<8x128xf32>
    %cst_114 = arith.constant 1.000000e+00 : f32
    %317 = vector.broadcast %cst_114 : f32 to vector<8x128xf32>
    %318 = arith.addf %317, %316 : vector<8x128xf32>
    %319 = arith.divf %317, %318 : vector<8x128xf32>
    %320 = arith.mulf %311, %293 : vector<8x128xf32>
    %321 = arith.mulf %305, %313 : vector<8x128xf32>
    %322 = arith.addf %320, %321 : vector<8x128xf32>
    %323 = math.tanh %322 : vector<8x128xf32>
    %324 = arith.mulf %319, %323 : vector<8x128xf32>
    %325 = arith.index_cast %291 : i32 to index
    %326 = memref.load %arg2[%325] : memref<8xi32, #tpu.memory_space<smem>>
    %327 = vector.broadcast %326 : i32 to vector<8x128xi32>
    %328 = arith.cmpi slt, %7, %327 : vector<8x128xi32>
    %329 = arith.select %328, %324, %292 : vector<8x128xi1>, vector<8x128xf32>
    %330 = arith.select %328, %322, %293 : vector<8x128xi1>, vector<8x128xf32>
    %c0_115 = arith.constant 0 : index
    %c0_116 = arith.constant 0 : index
    %331 = vector.load %arg10[%c0_115, %c0_116] : memref<8x128xf32, #tpu.memory_space<vmem>>, vector<8x128xf32>
    tpu.vector_store %arg10[%c0_115, %c0_116], %329 {strides = array<i32>} : memref<8x128xf32, #tpu.memory_space<vmem>>, vector<8x128xf32>,
    %c0_117 = arith.constant 0 : index
    %c0_118 = arith.constant 0 : index
    %332 = vector.load %arg11[%c0_117, %c0_118] : memref<8x128xf32, #tpu.memory_space<vmem>>, vector<8x128xf32>
    tpu.vector_store %arg11[%c0_117, %c0_118], %330 {strides = array<i32>} : memref<8x128xf32, #tpu.memory_space<vmem>>, vector<8x128xf32>,
    %333 = arith.index_cast %c6_i32 : i32 to index
    %c0_119 = arith.constant 0 : index
    %c0_120 = arith.constant 0 : index
    %334 = vector.load %arg7[%333, %c0_119, %c0_120] : memref<8x8x128xf32, #tpu.memory_space<vmem>>, vector<1x8x128xf32>
    %335 = vector.shape_cast %334 : vector<1x8x128xf32> to vector<8x128xf32>
    %336 = vector.shape_cast %329 : vector<8x128xf32> to vector<1x8x128xf32>
    tpu.vector_store %arg7[%333, %c0_119, %c0_120], %336 {strides = array<i32>} : memref<8x8x128xf32, #tpu.memory_space<vmem>>, vector<1x8x128xf32>,
    %c7_i32 = arith.constant 7 : i32
    %c8_i32_121 = arith.constant 8 : i32
    %337 = arith.muli %arg1, %c8_i32_121 : i32
    %338 = arith.addi %337, %c7_i32 : i32
    %c0_122 = arith.constant 0 : index
    %c0_123 = arith.constant 0 : index
    %339 = vector.load %arg10[%c0_122, %c0_123] : memref<8x128xf32, #tpu.memory_space<vmem>>, vector<8x128xf32>
    %c0_124 = arith.constant 0 : index
    %c0_125 = arith.constant 0 : index
    %340 = vector.load %arg11[%c0_124, %c0_125] : memref<8x128xf32, #tpu.memory_space<vmem>>, vector<8x128xf32>
    %341 = arith.index_cast %c7_i32 : i32 to index
    %c0_126 = arith.constant 0 : index
    %c0_127 = arith.constant 0 : index
    %342 = vector.load %arg3[%341, %c0_126, %c0_127] : memref<8x8x512xf32, #tpu.memory_space<vmem>>, vector<1x8x512xf32>
    %343 = vector.shape_cast %342 : vector<1x8x512xf32> to vector<8x512xf32>
    %344 = arith.truncf %339 : vector<8x128xf32> to vector<8x128xbf16>
    %cst_128 = arith.constant dense<0.000000e+00> : vector<8x512xf32>
    %345 = tpu.matmul %344, %3, %cst_128 {dimension_numbers = #tpu.dot_dimension_numbers<[1], [0], [0], [1], [0, 0, 1, 1], [], []>} : vector<8x128xbf16>, vector<128x512xbf16>, vector<8x512xf32> -> vector<8x512xf32>
    %346 = arith.addf %343, %345 : vector<8x512xf32>
    %347 = vector.extract_strided_slice %346 {offsets = [0, 0], sizes = [8, 128], strides = [1, 1]} : vector<8x512xf32> to vector<8x128xf32>
    %348 = arith.negf %347 : vector<8x128xf32>
    %349 = math.exp %348 : vector<8x128xf32>
    %cst_129 = arith.constant 1.000000e+00 : f32
    %350 = vector.broadcast %cst_129 : f32 to vector<8x128xf32>
    %351 = arith.addf %350, %349 : vector<8x128xf32>
    %352 = arith.divf %350, %351 : vector<8x128xf32>
    %353 = vector.extract_strided_slice %346 {offsets = [0, 128], sizes = [8, 128], strides = [1, 1]} : vector<8x512xf32> to vector<8x128xf32>
    %354 = arith.negf %353 : vector<8x128xf32>
    %355 = math.exp %354 : vector<8x128xf32>
    %cst_130 = arith.constant 1.000000e+00 : f32
    %356 = vector.broadcast %cst_130 : f32 to vector<8x128xf32>
    %357 = arith.addf %356, %355 : vector<8x128xf32>
    %358 = arith.divf %356, %357 : vector<8x128xf32>
    %359 = vector.extract_strided_slice %346 {offsets = [0, 256], sizes = [8, 128], strides = [1, 1]} : vector<8x512xf32> to vector<8x128xf32>
    %360 = math.tanh %359 : vector<8x128xf32>
    %361 = vector.extract_strided_slice %346 {offsets = [0, 384], sizes = [8, 128], strides = [1, 1]} : vector<8x512xf32> to vector<8x128xf32>
    %362 = arith.negf %361 : vector<8x128xf32>
    %363 = math.exp %362 : vector<8x128xf32>
    %cst_131 = arith.constant 1.000000e+00 : f32
    %364 = vector.broadcast %cst_131 : f32 to vector<8x128xf32>
    %365 = arith.addf %364, %363 : vector<8x128xf32>
    %366 = arith.divf %364, %365 : vector<8x128xf32>
    %367 = arith.mulf %358, %340 : vector<8x128xf32>
    %368 = arith.mulf %352, %360 : vector<8x128xf32>
    %369 = arith.addf %367, %368 : vector<8x128xf32>
    %370 = math.tanh %369 : vector<8x128xf32>
    %371 = arith.mulf %366, %370 : vector<8x128xf32>
    %372 = arith.index_cast %338 : i32 to index
    %373 = memref.load %arg2[%372] : memref<8xi32, #tpu.memory_space<smem>>
    %374 = vector.broadcast %373 : i32 to vector<8x128xi32>
    %375 = arith.cmpi slt, %7, %374 : vector<8x128xi32>
    %376 = arith.select %375, %371, %339 : vector<8x128xi1>, vector<8x128xf32>
    %377 = arith.select %375, %369, %340 : vector<8x128xi1>, vector<8x128xf32>
    %c0_132 = arith.constant 0 : index
    %c0_133 = arith.constant 0 : index
    %378 = vector.load %arg10[%c0_132, %c0_133] : memref<8x128xf32, #tpu.memory_space<vmem>>, vector<8x128xf32>
    tpu.vector_store %arg10[%c0_132, %c0_133], %376 {strides = array<i32>} : memref<8x128xf32, #tpu.memory_space<vmem>>, vector<8x128xf32>,
    %c0_134 = arith.constant 0 : index
    %c0_135 = arith.constant 0 : index
    %379 = vector.load %arg11[%c0_134, %c0_135] : memref<8x128xf32, #tpu.memory_space<vmem>>, vector<8x128xf32>
    tpu.vector_store %arg11[%c0_134, %c0_135], %377 {strides = array<i32>} : memref<8x128xf32, #tpu.memory_space<vmem>>, vector<8x128xf32>,
    %380 = arith.index_cast %c7_i32 : i32 to index
    %c0_136 = arith.constant 0 : index
    %c0_137 = arith.constant 0 : index
    %381 = vector.load %arg7[%380, %c0_136, %c0_137] : memref<8x8x128xf32, #tpu.memory_space<vmem>>, vector<1x8x128xf32>
    %382 = vector.shape_cast %381 : vector<1x8x128xf32> to vector<8x128xf32>
    %383 = vector.shape_cast %376 : vector<8x128xf32> to vector<1x8x128xf32>
    tpu.vector_store %arg7[%380, %c0_136, %c0_137], %383 {strides = array<i32>} : memref<8x8x128xf32, #tpu.memory_space<vmem>>, vector<1x8x128xf32>,
    %c8_i32_138 = arith.constant 8 : i32
    %c0_i32_139 = arith.constant 0 : i32
    %384 = arith.cmpi eq, %arg1, %c0_i32_139 : i32
    %385 = arith.extui %384 : i1 to i32
    %c0_i32_140 = arith.constant 0 : i32
    %386 = arith.cmpi ne, %385, %c0_i32_140 : i32
    scf.if %386 {
      %c0_141 = arith.constant 0 : index
      %c0_142 = arith.constant 0 : index
      %387 = vector.load %arg10[%c0_141, %c0_142] : memref<8x128xf32, #tpu.memory_space<vmem>>, vector<8x128xf32>
      %c0_143 = arith.constant 0 : index
      %c0_144 = arith.constant 0 : index
      %388 = vector.load %arg8[%c0_143, %c0_144] : memref<8x128xf32, #tpu.memory_space<vmem>>, vector<8x128xf32>
      tpu.vector_store %arg8[%c0_143, %c0_144], %387 {strides = array<i32>} : memref<8x128xf32, #tpu.memory_space<vmem>>, vector<8x128xf32>,
      %c0_145 = arith.constant 0 : index
      %c0_146 = arith.constant 0 : index
      %389 = vector.load %arg11[%c0_145, %c0_146] : memref<8x128xf32, #tpu.memory_space<vmem>>, vector<8x128xf32>
      %c0_147 = arith.constant 0 : index
      %c0_148 = arith.constant 0 : index
      %390 = vector.load %arg9[%c0_147, %c0_148] : memref<8x128xf32, #tpu.memory_space<vmem>>, vector<8x128xf32>
      tpu.vector_store %arg9[%c0_147, %c0_148], %389 {strides = array<i32>} : memref<8x128xf32, #tpu.memory_space<vmem>>, vector<8x128xf32>,
    } else {
    }
    return
  }
  func.func @transform_0(%arg0: i32, %arg1: i32, %arg2: memref<8xi32, #tpu.memory_space<smem>>) -> (i32, i32, i32) {
    %c0_i32 = arith.constant 0 : i32
    %c0_i32_0 = arith.constant 0 : i32
    return %arg1, %arg0, %c0_i32 : i32, i32, i32
  }
  func.func @transform_1(%arg0: i32, %arg1: i32, %arg2: memref<8xi32, #tpu.memory_space<smem>>) -> (i32, i32) {
    %c0_i32 = arith.constant 0 : i32
    %c0_i32_0 = arith.constant 0 : i32
    return %arg0, %c0_i32 : i32, i32
  }
  func.func @transform_2(%arg0: i32, %arg1: i32, %arg2: memref<8xi32, #tpu.memory_space<smem>>) -> (i32, i32) {
    %c0_i32 = arith.constant 0 : i32
    %c0_i32_0 = arith.constant 0 : i32
    return %arg0, %c0_i32 : i32, i32
  }
  func.func @transform_3(%arg0: i32, %arg1: i32, %arg2: memref<8xi32, #tpu.memory_space<smem>>) -> (i32, i32) {
    %c0_i32 = arith.constant 0 : i32
    %c0_i32_0 = arith.constant 0 : i32
    %c0_i32_1 = arith.constant 0 : i32
    return %c0_i32, %c0_i32_0 : i32, i32
  }
  func.func @transform_4(%arg0: i32, %arg1: i32, %arg2: memref<8xi32, #tpu.memory_space<smem>>) -> (i32, i32, i32) {
    %c0_i32 = arith.constant 0 : i32
    %c0_i32_0 = arith.constant 0 : i32
    return %arg1, %arg0, %c0_i32 : i32, i32, i32
  }
  func.func @transform_5(%arg0: i32, %arg1: i32, %arg2: memref<8xi32, #tpu.memory_space<smem>>) -> (i32, i32) {
    %c0_i32 = arith.constant 0 : i32
    %c0_i32_0 = arith.constant 0 : i32
    return %arg0, %c0_i32 : i32, i32
  }
  func.func @transform_6(%arg0: i32, %arg1: i32, %arg2: memref<8xi32, #tpu.memory_space<smem>>) -> (i32, i32) {
    %c0_i32 = arith.constant 0 : i32
    %c0_i32_0 = arith.constant 0 : i32
    return %arg0, %c0_i32 : i32, i32
  }
}

</mosaic_0001>

<llo_original>
// kernel: tpu_custom_call.1
$region0: #{tpu_custom_call.1}
  #allocation0 [shape = 'u32[]', space=smem, size = 0x4, offset = 0x4, fixed_abs, tag = 'smem constant byte address 0x4 - core index']
  #allocation1 [shape = 'u32[144,128]{1,0:T(1,128)}', space=vmem, size = 0x12000, scoped, tag = 'internal scratch']
  #allocation2 [shape = 'f32[8,128]{1,0:T(8,128)}', space=vmem, size = 0x1000, scoped, tag = 'scratch operand']
  #allocation3 [shape = 'f32[8,128]{1,0:T(8,128)}', space=vmem, size = 0x1000, scoped, tag = 'scratch operand']
  #allocation4 [shape = 's32[1]{0}', space=sflag, size = 0x4, scoped, tag = 'scoped memory for tpu_custom_call.1']
  #allocation5 [shape = 'u8[512]{0}', space=smem, size = 0x200, scoped, tag = 'prefetched SMEM operand 0']
  %s0 = inlined_call_operand.hbm [shape: s32[8], index: 0, kind: input, shape index: {}]
  %s1 = inlined_call_operand.hbm [shape: f32[8,8,512], index: 1, kind: input, shape index: {}]
  %s2 = inlined_call_operand.hbm [shape: f32[8,128], index: 2, kind: input, shape index: {}]
  %s3 = inlined_call_operand.vmem [shape: f32[8,128], index: 3, kind: input, shape index: {}]
  %s4 = inlined_call_operand.hbm [shape: bf16[128,512], index: 4, kind: input, shape index: {}]
  %s5 = inlined_call_operand.hbm [shape: f32[8,8,128], index: 5, kind: output, shape index: {0}]
  %s6 = inlined_call_operand.hbm [shape: f32[8,128], index: 6, kind: output, shape index: {1}]
  %s7 = inlined_call_operand.hbm [shape: f32[8,128], index: 7, kind: output, shape index: {2}]
  %8 = xla_tuple %s5, %s6, %s7
  %s9 = sld [smem:[#allocation0]]
  $region62: #{tpu_custom_call.1} parent=0
    _
  %s11 = ssub.s32 1, %s9
  %s12 = scalar_select 0, %s11, %s9
  %14 = dma.hbm_to_smem %s0, 16, [#allocation5], [#allocation4]
  %15 = dma.done [#allocation4], 16
  %16 = sfence
  $region1: #{tpu_custom_call.1} parent=0
    #allocation6 [shape = 'u8[131072]{0}', space=vmem, size = 0x20000, scoped, tag = 'input window, operand 1, single buffered']
    #allocation7 [shape = 's32[1]{0}', space=sflag, size = 0x4, scoped, tag = 'scoped memory for tpu_custom_call.1']
    #allocation8 [shape = 's32[1]{0}', space=sflag, size = 0x4, scoped, tag = 'scoped memory for tpu_custom_call.1']
    #allocation9 [shape = 'u8[4096]{0}', space=vmem, size = 0x1000, scoped, tag = 'input window, operand 2, single buffered']
    #allocation10 [shape = 's32[1]{0}', space=sflag, size = 0x4, scoped, tag = 'scoped memory for tpu_custom_call.1']
    #allocation11 [shape = 'u8[131072]{0}', space=vmem, size = 0x20000, scoped, tag = 'input window, operand 4, single buffered']
    #allocation12 [shape = 'u8[32768]{0}', space=vmem, size = 0x8000, scoped, tag = 'output window, operand 0, single buffered']
    #allocation13 [shape = 'u8[4096]{0}', space=vmem, size = 0x1000, scoped, tag = 'output window, operand 1, single buffered']
    #allocation14 [shape = 's32[1]{0}', space=sflag, size = 0x4, scoped, tag = 'scoped memory for tpu_custom_call.1']
    #allocation15 [shape = 'u8[4096]{0}', space=vmem, size = 0x1000, scoped, tag = 'output window, operand 2, single buffered']
    %17 = vsyncpa [#allocation7], 0
    %18 = vsyncpa [#allocation10], 0
    %19 = vsyncpa [#allocation8], 0
    %20 = vsyncpa [#allocation14], 0
    // Predicated region
    $region2: #{tpu_custom_call.1} parent=1 // pred_check
      _
    $region3: #{tpu_custom_call.1} parent=1 // pred_check_branch
      %22 = sbr.rel (0) target = $region5
    $region4: #{tpu_custom_call.1} parent=1 // pred_region
      %s24 = ssub.s32 4096, 4096
      %25 = vsyncadd [#allocation7], %s24
      %s26 = sshll.u32 [#allocation6], 4
      %s27 = int_to_ptr.vmem [resolvable:$true] %s26
      %32 = dma.hbm_to_vmem [thread:$0]  %s1, 4096, %s27, [#allocation7], 512, 512, 32
    $region5: #{tpu_custom_call.1} parent=1 // pred_fallthru
      _
    // Predicated region
    $region6: #{tpu_custom_call.1} parent=1 // pred_check
      _
    $region7: #{tpu_custom_call.1} parent=1 // pred_check_branch
      %34 = sbr.rel (0) target = $region9
    $region8: #{tpu_custom_call.1} parent=1 // pred_region
      %s36 = ssub.s32 128, 128
      %37 = vsyncadd [#allocation10], %s36
      %s39 = sshll.u32 [#allocation9], 4
      %s40 = int_to_ptr.vmem [resolvable:$true] %s39
      %42 = dma.hbm_to_vmem [thread:$0]  %s2, 128, %s40, [#allocation10]
    $region9: #{tpu_custom_call.1} parent=1 // pred_fallthru
      _
    // Predicated region
    $region10: #{tpu_custom_call.1} parent=1 // pred_check
      _
    $region11: #{tpu_custom_call.1} parent=1 // pred_check_branch
      %44 = sbr.rel (0) target = $region13
    $region12: #{tpu_custom_call.1} parent=1 // pred_region
      _
    $region13: #{tpu_custom_call.1} parent=1 // pred_fallthru
      _
    // Predicated region
    $region14: #{tpu_custom_call.1} parent=1 // pred_check
      _
    $region15: #{tpu_custom_call.1} parent=1 // pred_check_branch
      %46 = sbr.rel (0) target = $region17
    $region16: #{tpu_custom_call.1} parent=1 // pred_region
      %s48 = ssub.s32 4096, 4096
      %49 = vsyncadd [#allocation10], %s48
      %s50 = sshll.u32 [#allocation11], 4
      %s51 = int_to_ptr.vmem [resolvable:$true] %s50
      %56 = dma.hbm_to_vmem [thread:$0]  %s4, 4096, %s51, [#allocation10], 256, 256, 16
    $region17: #{tpu_custom_call.1} parent=1 // pred_fallthru
      _
    // Predicated region
    $region18: #{tpu_custom_call.1} parent=1 // pred_check
      _
    $region19: #{tpu_custom_call.1} parent=1 // pred_check_branch
      %58 = sbr.rel (0) target = $region21
    $region20: #{tpu_custom_call.1} parent=1 // pred_region
      %59 = dma.done [#allocation7], 4096
    $region21: #{tpu_custom_call.1} parent=1 // pred_fallthru
      _
    // Predicated region
    $region22: #{tpu_custom_call.1} parent=1 // pred_check
      _
    $region23: #{tpu_custom_call.1} parent=1 // pred_check_branch
      %61 = sbr.rel (0) target = $region25
    $region24: #{tpu_custom_call.1} parent=1 // pred_region
      %62 = dma.done [#allocation10], 128
    $region25: #{tpu_custom_call.1} parent=1 // pred_fallthru
      _
    // Predicated region
    $region26: #{tpu_custom_call.1} parent=1 // pred_check
      _
    $region27: #{tpu_custom_call.1} parent=1 // pred_check_branch
      %64 = sbr.rel (0) target = $region29
    $region28: #{tpu_custom_call.1} parent=1 // pred_region
      %65 = dma.done [#allocation10], 4096
    $region29: #{tpu_custom_call.1} parent=1 // pred_fallthru
      _
    %p67 = scmp.eq.s32.totalorder 0, 0
    // Predicated region
    $region30: #{tpu_custom_call.1} parent=1 // pred_check
      %p68 = pneg %p67
    $region31: #{tpu_custom_call.1} parent=1 // pred_check_branch
      %70 = sbr.rel (%p68) target = $region33
    $region32: #{tpu_custom_call.1} parent=1 // pred_region
      %v71 = vld [vmem:[#allocation9] sm:$0xff]
      %72 = vst [vmem:[#allocation2] sm:$0xff] %v71
      %v73 = vld [vmem:[%s3] sm:$0xff]
      %74 = vst [vmem:[#allocation3] sm:$0xff] %v73
    $region33: #{tpu_custom_call.1} parent=1 // pred_fallthru
      _
    %v75 = vld [vmem:[#allocation11] sm:$0xff]
    %v76 = vld [vmem:[#allocation11 + $0x8] sm:$0xff]
    %v77 = vld [vmem:[#allocation11 + $0x10] sm:$0xff]
    %v78 = vld [vmem:[#allocation11 + $0x18] sm:$0xff]
    %v79 = vld [vmem:[#allocation11 + $0x20] sm:$0xff]
    %v80 = vld [vmem:[#allocation11 + $0x28] sm:$0xff]
    %v81 = vld [vmem:[#allocation11 + $0x30] sm:$0xff]
    %v82 = vld [vmem:[#allocation11 + $0x38] sm:$0xff]
    %v83 = vld [vmem:[#allocation11 + $0x40] sm:$0xff]
    %v84 = vld [vmem:[#allocation11 + $0x48] sm:$0xff]
    %v85 = vld [vmem:[#allocation11 + $0x50] sm:$0xff]
    %v86 = vld [vmem:[#allocation11 + $0x58] sm:$0xff]
    %v87 = vld [vmem:[#allocation11 + $0x60] sm:$0xff]
    %v88 = vld [vmem:[#allocation11 + $0x68] sm:$0xff]
    %v89 = vld [vmem:[#allocation11 + $0x70] sm:$0xff]
    %v90 = vld [vmem:[#allocation11 + $0x78] sm:$0xff]
    %v91 = vld [vmem:[#allocation11 + $0x80] sm:$0xff]
    %v92 = vld [vmem:[#allocation11 + $0x88] sm:$0xff]
    %v93 = vld [vmem:[#allocation11 + $0x90] sm:$0xff]
    %v94 = vld [vmem:[#allocation11 + $0x98] sm:$0xff]
    %v95 = vld [vmem:[#allocation11 + $0xa0] sm:$0xff]
    %v96 = vld [vmem:[#allocation11 + $0xa8] sm:$0xff]
    %v97 = vld [vmem:[#allocation11 + $0xb0] sm:$0xff]
    %v98 = vld [vmem:[#allocation11 + $0xb8] sm:$0xff]
    %v99 = vld [vmem:[#allocation11 + $0xc0] sm:$0xff]
    %v100 = vld [vmem:[#allocation11 + $0xc8] sm:$0xff]
    %v101 = vld [vmem:[#allocation11 + $0xd0] sm:$0xff]
    %v102 = vld [vmem:[#allocation11 + $0xd8] sm:$0xff]
    %v103 = vld [vmem:[#allocation11 + $0xe0] sm:$0xff]
    %v104 = vld [vmem:[#allocation11 + $0xe8] sm:$0xff]
    %v105 = vld [vmem:[#allocation11 + $0xf0] sm:$0xff]
    %v106 = vld [vmem:[#allocation11 + $0xf8] sm:$0xff]
    %v107 = vlaneseq
    %v108 = vshrl.u32 %v107, 7
    %s109 = smul.u32 0, 8
    %v110 = vstv %s109
    %v111 = vadd.s32 %v108, %v110
    %s112 = smul.u32 0, 8
    %v113 = vld [vmem:[#allocation2] sm:$0xff]
    %v114 = vld [vmem:[#allocation3] sm:$0xff]
    %v115 = vld [vmem:[#allocation6] sm:$0xff]
    %v116 = vld [vmem:[#allocation6 + $0x8] sm:$0xff]
    %v117 = vld [vmem:[#allocation6 + $0x10] sm:$0xff]
    %v118 = vld [vmem:[#allocation6 + $0x18] sm:$0xff]
    %v119 = vpack.c.bf16 %v113, %v113
    %v152 = vunpack.c.l.b16 %v75
    %v153 = vunpack.c.h.b16 %v75
    %v154 = vunpack.c.l.b16 %v76
    %v155 = vunpack.c.h.b16 %v76
    %v156 = vunpack.c.l.b16 %v77
    %v157 = vunpack.c.h.b16 %v77
    %v158 = vunpack.c.l.b16 %v78
    %v159 = vunpack.c.h.b16 %v78
    %v160 = vunpack.c.l.b16 %v79
    %v161 = vunpack.c.h.b16 %v79
    %v162 = vunpack.c.l.b16 %v80
    %v163 = vunpack.c.h.b16 %v80
    %v164 = vunpack.c.l.b16 %v81
    %v165 = vunpack.c.h.b16 %v81
    %v166 = vunpack.c.l.b16 %v82
    %v167 = vunpack.c.h.b16 %v82
    %v168 = vunpack.c.l.b16 %v83
    %v169 = vunpack.c.h.b16 %v83
    %v170 = vunpack.c.l.b16 %v84
    %v171 = vunpack.c.h.b16 %v84
    %v172 = vunpack.c.l.b16 %v85
    %v173 = vunpack.c.h.b16 %v85
    %v174 = vunpack.c.l.b16 %v86
    %v175 = vunpack.c.h.b16 %v86
    %v176 = vunpack.c.l.b16 %v87
    %v177 = vunpack.c.h.b16 %v87
    %v178 = vunpack.c.l.b16 %v88
    %v179 = vunpack.c.h.b16 %v88
    %v180 = vunpack.c.l.b16 %v89
    %v181 = vunpack.c.h.b16 %v89
    %v182 = vunpack.c.l.b16 %v90
    %v183 = vunpack.c.h.b16 %v90
    %v184 = vunpack.c.l.b16 %v91
    %v185 = vunpack.c.h.b16 %v91
    %v186 = vunpack.c.l.b16 %v92
    %v187 = vunpack.c.h.b16 %v92
    %v188 = vunpack.c.l.b16 %v93
    %v189 = vunpack.c.h.b16 %v93
    %v190 = vunpack.c.l.b16 %v94
    %v191 = vunpack.c.h.b16 %v94
    %v192 = vunpack.c.l.b16 %v95
    %v193 = vunpack.c.h.b16 %v95
    %v194 = vunpack.c.l.b16 %v96
    %v195 = vunpack.c.h.b16 %v96
    %v196 = vunpack.c.l.b16 %v97
    %v197 = vunpack.c.h.b16 %v97
    %v198 = vunpack.c.l.b16 %v98
    %v199 = vunpack.c.h.b16 %v98
    %v200 = vunpack.c.l.b16 %v99
    %v201 = vunpack.c.h.b16 %v99
    %v202 = vunpack.c.l.b16 %v100
    %v203 = vunpack.c.h.b16 %v100
    %v204 = vunpack.c.l.b16 %v101
    %v205 = vunpack.c.h.b16 %v101
    %v206 = vunpack.c.l.b16 %v102
    %v207 = vunpack.c.h.b16 %v102
    %v208 = vunpack.c.l.b16 %v103
    %v209 = vunpack.c.h.b16 %v103
    %v210 = vunpack.c.l.b16 %v104
    %v211 = vunpack.c.h.b16 %v104
    %v212 = vunpack.c.l.b16 %v105
    %v213 = vunpack.c.h.b16 %v105
    %v214 = vunpack.c.l.b16 %v106
    %v215 = vunpack.c.h.b16 %v106
    %v216 = vpack.c.b16 %v156, %v152
    %v217 = vpack.c.b16 %v157, %v153
    %v218 = vpack.c.b16 %v158, %v154
    %v219 = vpack.c.b16 %v159, %v155
    %v220 = vpack.c.b16 %v164, %v160
    %v221 = vpack.c.b16 %v165, %v161
    %v222 = vpack.c.b16 %v166, %v162
    %v223 = vpack.c.b16 %v167, %v163
    %v224 = vpack.c.b16 %v172, %v168
    %v225 = vpack.c.b16 %v173, %v169
    %v226 = vpack.c.b16 %v174, %v170
    %v227 = vpack.c.b16 %v175, %v171
    %v228 = vpack.c.b16 %v180, %v176
    %v229 = vpack.c.b16 %v181, %v177
    %v230 = vpack.c.b16 %v182, %v178
    %v231 = vpack.c.b16 %v183, %v179
    %v232 = vpack.c.b16 %v188, %v184
    %v233 = vpack.c.b16 %v189, %v185
    %v234 = vpack.c.b16 %v190, %v186
    %v235 = vpack.c.b16 %v191, %v187
    %v236 = vpack.c.b16 %v196, %v192
    %v237 = vpack.c.b16 %v197, %v193
    %v238 = vpack.c.b16 %v198, %v194
    %v239 = vpack.c.b16 %v199, %v195
    %v240 = vpack.c.b16 %v204, %v200
    %v241 = vpack.c.b16 %v205, %v201
    %v242 = vpack.c.b16 %v206, %v202
    %v243 = vpack.c.b16 %v207, %v203
    %v244 = vpack.c.b16 %v212, %v208
    %v245 = vpack.c.b16 %v213, %v209
    %v246 = vpack.c.b16 %v214, %v210
    %v247 = vpack.c.b16 %v215, %v211
    %280 = vmatprep.subr.bf16.mxu0 %v217
    %281 = vmatpush1.bf16.msra.mxu0 %v216
    %282 = vmatprep.subr.bf16.mxu0 %v221
    %283 = vmatpush1.bf16.msra.mxu0 %v220
    %284 = vmatprep.subr.bf16.mxu0 %v225
    %285 = vmatpush1.bf16.msra.mxu0 %v224
    %286 = vmatprep.subr.bf16.mxu0 %v229
    %287 = vmatpush1.bf16.msra.mxu0 %v228
    %288 = vmatprep.subr.bf16.mxu0 %v233
    %289 = vmatpush1.bf16.msra.mxu0 %v232
    %290 = vmatprep.subr.bf16.mxu0 %v237
    %291 = vmatpush1.bf16.msra.mxu0 %v236
    %292 = vmatprep.subr.bf16.mxu0 %v241
    %293 = vmatpush1.bf16.msra.mxu0 %v240
    %294 = vmatprep.subr.bf16.mxu0 %v245
    %295 = vmatpush1.bf16.msra.mxu0 %v244
    %296 = vmatprep.subr.bf16.mxu0 0
    %297 = vmatpush1.bf16.msra.mxu0 0
    %298 = vmatprep.subr.bf16.mxu0 0
    %299 = vmatpush1.bf16.msra.mxu0 0
    %300 = vmatprep.subr.bf16.mxu0 0
    %301 = vmatpush1.bf16.msra.mxu0 0
    %302 = vmatprep.subr.bf16.mxu0 0
    %303 = vmatpush1.bf16.msra.mxu0 0
    %304 = vmatprep.subr.bf16.mxu0 0
    %305 = vmatpush1.bf16.msra.mxu0 0
    %306 = vmatprep.subr.bf16.mxu0 0
    %307 = vmatpush1.bf16.msra.mxu0 0
    %308 = vmatprep.subr.bf16.mxu0 0
    %309 = vmatpush1.bf16.msra.mxu0 0
    %310 = vmatprep.subr.bf16.mxu0 0
    %311 = vmatpush1.bf16.msra.mxu0 0
    %312 = vmatprep.mubr.bf16.mxu0 0
    %313 = vmatmul.mubr.bf16.gmra.mrb[0].mxu0 %v119
    %v314 = vpop.f32.mrb[0].mxu0
    %v315 = vadd.f32 0.0, %v314
    %v316 = vpop.f32.mrb[0].mxu0
    %v317 = vadd.f32 0.0, %v316
    %v318 = vpop.f32.mrb[0].mxu0
    %v319 = vpop.f32.mrb[0].mxu0
    %320 = vdwg.mxu0
    %321 = vmatprep.subr.bf16.mxu0 %v219
    %322 = vmatpush1.bf16.msra.mxu0 %v218
    %323 = vmatprep.subr.bf16.mxu0 %v223
    %324 = vmatpush1.bf16.msra.mxu0 %v222
    %325 = vmatprep.subr.bf16.mxu0 %v227
    %326 = vmatpush1.bf16.msra.mxu0 %v226
    %327 = vmatprep.subr.bf16.mxu0 %v231
    %328 = vmatpush1.bf16.msra.mxu0 %v230
    %329 = vmatprep.subr.bf16.mxu0 %v235
    %330 = vmatpush1.bf16.msra.mxu0 %v234
    %331 = vmatprep.subr.bf16.mxu0 %v239
    %332 = vmatpush1.bf16.msra.mxu0 %v238
    %333 = vmatprep.subr.bf16.mxu0 %v243
    %334 = vmatpush1.bf16.msra.mxu0 %v242
    %335 = vmatprep.subr.bf16.mxu0 %v247
    %336 = vmatpush1.bf16.msra.mxu0 %v246
    %337 = vmatprep.subr.bf16.mxu0 0
    %338 = vmatpush1.bf16.msra.mxu0 0
    %339 = vmatprep.subr.bf16.mxu0 0
    %340 = vmatpush1.bf16.msra.mxu0 0
    %341 = vmatprep.subr.bf16.mxu0 0
    %342 = vmatpush1.bf16.msra.mxu0 0
    %343 = vmatprep.subr.bf16.mxu0 0
    %344 = vmatpush1.bf16.msra.mxu0 0
    %345 = vmatprep.subr.bf16.mxu0 0
    %346 = vmatpush1.bf16.msra.mxu0 0
    %347 = vmatprep.subr.bf16.mxu0 0
    %348 = vmatpush1.bf16.msra.mxu0 0
    %349 = vmatprep.subr.bf16.mxu0 0
    %350 = vmatpush1.bf16.msra.mxu0 0
    %351 = vmatprep.subr.bf16.mxu0 0
    %352 = vmatpush1.bf16.msra.mxu0 0
    %353 = vmatprep.mubr.bf16.mxu0 0
    %354 = vmatmul.mubr.bf16.gmra.mrb[0].mxu0 %v119
    %v355 = vpop.f32.mrb[0].mxu0
    %v356 = vadd.f32 0.0, %v355
    %v357 = vpop.f32.mrb[0].mxu0
    %v358 = vadd.f32 0.0, %v357
    %v359 = vpop.f32.mrb[0].mxu0
    %v360 = vpop.f32.mrb[0].mxu0
    %361 = vdwg.mxu0
    %v362 = vadd.f32 %v115, %v315
    %v363 = vadd.f32 %v116, %v317
    %v364 = vadd.f32 %v117, %v356
    %v365 = vadd.f32 %v118, %v358
    %v366 = vxor.u32 %v362, 2147483648
    %v367 = vmul.f32 %v366, 1.442695
    %v368 = vpow.pop %v367
    %v369 = vadd.f32 %v368, 1.0
    %v370 = vrcp.pop %v369
    %v371 = vmul.f32 1.0, %v370
    %v372 = vxor.u32 %v363, 2147483648
    %v373 = vmul.f32 %v372, 1.442695
    %v374 = vpow.pop %v373
    %v375 = vadd.f32 %v374, 1.0
    %v376 = vrcp.pop %v375
    %v377 = vmul.f32 1.0, %v376
    %v378 = vtanh.pop %v364
    %v379 = vxor.u32 %v365, 2147483648
    %v380 = vmul.f32 %v379, 1.442695
    %v381 = vpow.pop %v380
    %v382 = vadd.f32 %v381, 1.0
    %v383 = vrcp.pop %v382
    %v384 = vmul.f32 1.0, %v383
    %v385 = vmul.f32 %v377, %v114
    %v386 = vmul.f32 %v371, %v378
    %v387 = vadd.f32 %v385, %v386
    %v388 = vtanh.pop %v387
    %v389 = vmul.f32 %v384, %v388
    %s390 = sld [smem:[#allocation5 + %s112]]
    %v391 = vstv %s390
    %vm392 = vcmp.lt.s32.totalorder %v111, %v391
    %v393 = vsel %vm392, %v389, %v113
    %v394 = vsel %vm392, %v387, %v114
    %395 = vst [vmem:[#allocation2] sm:$0xff] %v393
    %396 = vst [vmem:[#allocation3] sm:$0xff] %v394
    %397 = vst [vmem:[#allocation12] sm:$0xff] %v393
    %s398 = sadd.s32 %s112, 1
    %v399 = vld [vmem:[#allocation2] sm:$0xff]
    %v400 = vld [vmem:[#allocation3] sm:$0xff]
    %s401 = scalar_lea.vmem [#allocation6], 32
    %v402 = vld [vmem:[%s401] sm:$0xff]
    %v403 = vld [vmem:[%s401 + $0x8] sm:$0xff]
    %v404 = vld [vmem:[%s401 + $0x10] sm:$0xff]
    %v405 = vld [vmem:[%s401 + $0x18] sm:$0xff]
    %v406 = vpack.c.bf16 %v399, %v399
    %407 = vmatprep.subr.bf16.mxu0 %v217
    %408 = vmatpush1.bf16.msra.mxu0 %v216
    %409 = vmatprep.subr.bf16.mxu0 %v221
    %410 = vmatpush1.bf16.msra.mxu0 %v220
    %411 = vmatprep.subr.bf16.mxu0 %v225
    %412 = vmatpush1.bf16.msra.mxu0 %v224
    %413 = vmatprep.subr.bf16.mxu0 %v229
    %414 = vmatpush1.bf16.msra.mxu0 %v228
    %415 = vmatprep.subr.bf16.mxu0 %v233
    %416 = vmatpush1.bf16.msra.mxu0 %v232
    %417 = vmatprep.subr.bf16.mxu0 %v237
    %418 = vmatpush1.bf16.msra.mxu0 %v236
    %419 = vmatprep.subr.bf16.mxu0 %v241
    %420 = vmatpush1.bf16.msra.mxu0 %v240
    %421 = vmatprep.subr.bf16.mxu0 %v245
    %422 = vmatpush1.bf16.msra.mxu0 %v244
    %423 = vmatprep.subr.bf16.mxu0 0
    %424 = vmatpush1.bf16.msra.mxu0 0
    %425 = vmatprep.subr.bf16.mxu0 0
    %426 = vmatpush1.bf16.msra.mxu0 0
    %427 = vmatprep.subr.bf16.mxu0 0
    %428 = vmatpush1.bf16.msra.mxu0 0
    %429 = vmatprep.subr.bf16.mxu0 0
    %430 = vmatpush1.bf16.msra.mxu0 0
    %431 = vmatprep.subr.bf16.mxu0 0
    %432 = vmatpush1.bf16.msra.mxu0 0
    %433 = vmatprep.subr.bf16.mxu0 0
    %434 = vmatpush1.bf16.msra.mxu0 0
    %435 = vmatprep.subr.bf16.mxu0 0
    %436 = vmatpush1.bf16.msra.mxu0 0
    %437 = vmatprep.subr.bf16.mxu0 0
    %438 = vmatpush1.bf16.msra.mxu0 0
    %439 = vmatprep.mubr.bf16.mxu0 0
    %440 = vmatmul.mubr.bf16.gmra.mrb[0].mxu0 %v406
    %v441 = vpop.f32.mrb[0].mxu0
    %v442 = vadd.f32 0.0, %v441
    %v443 = vpop.f32.mrb[0].mxu0
    %v444 = vadd.f32 0.0, %v443
    %v445 = vpop.f32.mrb[0].mxu0
    %v446 = vpop.f32.mrb[0].mxu0
    %447 = vdwg.mxu0
    %448 = vmatprep.subr.bf16.mxu0 %v219
    %449 = vmatpush1.bf16.msra.mxu0 %v218
    %450 = vmatprep.subr.bf16.mxu0 %v223
    %451 = vmatpush1.bf16.msra.mxu0 %v222
    %452 = vmatprep.subr.bf16.mxu0 %v227
    %453 = vmatpush1.bf16.msra.mxu0 %v226
    %454 = vmatprep.subr.bf16.mxu0 %v231
    %455 = vmatpush1.bf16.msra.mxu0 %v230
    %456 = vmatprep.subr.bf16.mxu0 %v235
    %457 = vmatpush1.bf16.msra.mxu0 %v234
    %458 = vmatprep.subr.bf16.mxu0 %v239
    %459 = vmatpush1.bf16.msra.mxu0 %v238
    %460 = vmatprep.subr.bf16.mxu0 %v243
    %461 = vmatpush1.bf16.msra.mxu0 %v242
    %462 = vmatprep.subr.bf16.mxu0 %v247
    %463 = vmatpush1.bf16.msra.mxu0 %v246
    %464 = vmatprep.subr.bf16.mxu0 0
    %465 = vmatpush1.bf16.msra.mxu0 0
    %466 = vmatprep.subr.bf16.mxu0 0
    %467 = vmatpush1.bf16.msra.mxu0 0
    %468 = vmatprep.subr.bf16.mxu0 0
    %469 = vmatpush1.bf16.msra.mxu0 0
    %470 = vmatprep.subr.bf16.mxu0 0
    %471 = vmatpush1.bf16.msra.mxu0 0
    %472 = vmatprep.subr.bf16.mxu0 0
    %473 = vmatpush1.bf16.msra.mxu0 0
    %474 = vmatprep.subr.bf16.mxu0 0
    %475 = vmatpush1.bf16.msra.mxu0 0
    %476 = vmatprep.subr.bf16.mxu0 0
    %477 = vmatpush1.bf16.msra.mxu0 0
    %478 = vmatprep.subr.bf16.mxu0 0
    %479 = vmatpush1.bf16.msra.mxu0 0
    %480 = vmatprep.mubr.bf16.mxu0 0
    %481 = vmatmul.mubr.bf16.gmra.mrb[0].mxu0 %v406
    %v482 = vpop.f32.mrb[0].mxu0
    %v483 = vadd.f32 0.0, %v482
    %v484 = vpop.f32.mrb[0].mxu0
    %v485 = vadd.f32 0.0, %v484
    %v486 = vpop.f32.mrb[0].mxu0
    %v487 = vpop.f32.mrb[0].mxu0
    %488 = vdwg.mxu0
    %v489 = vadd.f32 %v402, %v442
    %v490 = vadd.f32 %v403, %v444
    %v491 = vadd.f32 %v404, %v483
    %v492 = vadd.f32 %v405, %v485
    %v493 = vxor.u32 %v489, 2147483648
    %v494 = vmul.f32 %v493, 1.442695
    %v495 = vpow.pop %v494
    %v496 = vadd.f32 %v495, 1.0
    %v497 = vrcp.pop %v496
    %v498 = vmul.f32 1.0, %v497
    %v499 = vxor.u32 %v490, 2147483648
    %v500 = vmul.f32 %v499, 1.442695
    %v501 = vpow.pop %v500
    %v502 = vadd.f32 %v501, 1.0
    %v503 = vrcp.pop %v502
    %v504 = vmul.f32 1.0, %v503
    %v505 = vtanh.pop %v491
    %v506 = vxor.u32 %v492, 2147483648
    %v507 = vmul.f32 %v506, 1.442695
    %v508 = vpow.pop %v507
    %v509 = vadd.f32 %v508, 1.0
    %v510 = vrcp.pop %v509
    %v511 = vmul.f32 1.0, %v510
    %v512 = vmul.f32 %v504, %v400
    %v513 = vmul.f32 %v498, %v505
    %v514 = vadd.f32 %v512, %v513
    %v515 = vtanh.pop %v514
    %v516 = vmul.f32 %v511, %v515
    %s517 = sld [smem:[#allocation5 + %s398]]
    %v518 = vstv %s517
    %vm519 = vcmp.lt.s32.totalorder %v111, %v518
    %v520 = vsel %vm519, %v516, %v399
    %v521 = vsel %vm519, %v514, %v400
    %522 = vst [vmem:[#allocation2] sm:$0xff] %v520
    %523 = vst [vmem:[#allocation3] sm:$0xff] %v521
    %s524 = scalar_lea.vmem [#allocation12], 8
    %525 = vst [vmem:[%s524] sm:$0xff] %v520
    %s526 = sadd.s32 %s112, 2
    %v527 = vld [vmem:[#allocation2] sm:$0xff]
    %v528 = vld [vmem:[#allocation3] sm:$0xff]
    %s529 = scalar_lea.vmem [#allocation6], 64
    %v530 = vld [vmem:[%s529] sm:$0xff]
    %v531 = vld [vmem:[%s529 + $0x8] sm:$0xff]
    %v532 = vld [vmem:[%s529 + $0x10] sm:$0xff]
    %v533 = vld [vmem:[%s529 + $0x18] sm:$0xff]
    %v534 = vpack.c.bf16 %v527, %v527
    %535 = vmatprep.subr.bf16.mxu0 %v217
    %536 = vmatpush1.bf16.msra.mxu0 %v216
    %537 = vmatprep.subr.bf16.mxu0 %v221
    %538 = vmatpush1.bf16.msra.mxu0 %v220
    %539 = vmatprep.subr.bf16.mxu0 %v225
    %540 = vmatpush1.bf16.msra.mxu0 %v224
    %541 = vmatprep.subr.bf16.mxu0 %v229
    %542 = vmatpush1.bf16.msra.mxu0 %v228
    %543 = vmatprep.subr.bf16.mxu0 %v233
    %544 = vmatpush1.bf16.msra.mxu0 %v232
    %545 = vmatprep.subr.bf16.mxu0 %v237
    %546 = vmatpush1.bf16.msra.mxu0 %v236
    %547 = vmatprep.subr.bf16.mxu0 %v241
    %548 = vmatpush1.bf16.msra.mxu0 %v240
    %549 = vmatprep.subr.bf16.mxu0 %v245
    %550 = vmatpush1.bf16.msra.mxu0 %v244
    %551 = vmatprep.subr.bf16.mxu0 0
    %552 = vmatpush1.bf16.msra.mxu0 0
    %553 = vmatprep.subr.bf16.mxu0 0
    %554 = vmatpush1.bf16.msra.mxu0 0
    %555 = vmatprep.subr.bf16.mxu0 0
    %556 = vmatpush1.bf16.msra.mxu0 0
    %557 = vmatprep.subr.bf16.mxu0 0
    %558 = vmatpush1.bf16.msra.mxu0 0
    %559 = vmatprep.subr.bf16.mxu0 0
    %560 = vmatpush1.bf16.msra.mxu0 0
    %561 = vmatprep.subr.bf16.mxu0 0
    %562 = vmatpush1.bf16.msra.mxu0 0
    %563 = vmatprep.subr.bf16.mxu0 0
    %564 = vmatpush1.bf16.msra.mxu0 0
    %565 = vmatprep.subr.bf16.mxu0 0
    %566 = vmatpush1.bf16.msra.mxu0 0
    %567 = vmatprep.mubr.bf16.mxu0 0
    %568 = vmatmul.mubr.bf16.gmra.mrb[0].mxu0 %v534
    %v569 = vpop.f32.mrb[0].mxu0
    %v570 = vadd.f32 0.0, %v569
    %v571 = vpop.f32.mrb[0].mxu0
    %v572 = vadd.f32 0.0, %v571
    %v573 = vpop.f32.mrb[0].mxu0
    %v574 = vpop.f32.mrb[0].mxu0
    %575 = vdwg.mxu0
    %576 = vmatprep.subr.bf16.mxu0 %v219
    %577 = vmatpush1.bf16.msra.mxu0 %v218
    %578 = vmatprep.subr.bf16.mxu0 %v223
    %579 = vmatpush1.bf16.msra.mxu0 %v222
    %580 = vmatprep.subr.bf16.mxu0 %v227
    %581 = vmatpush1.bf16.msra.mxu0 %v226
    %582 = vmatprep.subr.bf16.mxu0 %v231
    %583 = vmatpush1.bf16.msra.mxu0 %v230
    %584 = vmatprep.subr.bf16.mxu0 %v235
    %585 = vmatpush1.bf16.msra.mxu0 %v234
    %586 = vmatprep.subr.bf16.mxu0 %v239
    %587 = vmatpush1.bf16.msra.mxu0 %v238
    %588 = vmatprep.subr.bf16.mxu0 %v243
    %589 = vmatpush1.bf16.msra.mxu0 %v242
    %590 = vmatprep.subr.bf16.mxu0 %v247
    %591 = vmatpush1.bf16.msra.mxu0 %v246
    %592 = vmatprep.subr.bf16.mxu0 0
    %593 = vmatpush1.bf16.msra.mxu0 0
    %594 = vmatprep.subr.bf16.mxu0 0
    %595 = vmatpush1.bf16.msra.mxu0 0
    %596 = vmatprep.subr.bf16.mxu0 0
    %597 = vmatpush1.bf16.msra.mxu0 0
    %598 = vmatprep.subr.bf16.mxu0 0
    %599 = vmatpush1.bf16.msra.mxu0 0
    %600 = vmatprep.subr.bf16.mxu0 0
    %601 = vmatpush1.bf16.msra.mxu0 0
    %602 = vmatprep.subr.bf16.mxu0 0
    %603 = vmatpush1.bf16.msra.mxu0 0
    %604 = vmatprep.subr.bf16.mxu0 0
    %605 = vmatpush1.bf16.msra.mxu0 0
    %606 = vmatprep.subr.bf16.mxu0 0
    %607 = vmatpush1.bf16.msra.mxu0 0
    %608 = vmatprep.mubr.bf16.mxu0 0
    %609 = vmatmul.mubr.bf16.gmra.mrb[0].mxu0 %v534
    %v610 = vpop.f32.mrb[0].mxu0
    %v611 = vadd.f32 0.0, %v610
    %v612 = vpop.f32.mrb[0].mxu0
    %v613 = vadd.f32 0.0, %v612
    %v614 = vpop.f32.mrb[0].mxu0
    %v615 = vpop.f32.mrb[0].mxu0
    %616 = vdwg.mxu0
    %v617 = vadd.f32 %v530, %v570
    %v618 = vadd.f32 %v531, %v572
    %v619 = vadd.f32 %v532, %v611
    %v620 = vadd.f32 %v533, %v613
    %v621 = vxor.u32 %v617, 2147483648
    %v622 = vmul.f32 %v621, 1.442695
    %v623 = vpow.pop %v622
    %v624 = vadd.f32 %v623, 1.0
    %v625 = vrcp.pop %v624
    %v626 = vmul.f32 1.0, %v625
    %v627 = vxor.u32 %v618, 2147483648
    %v628 = vmul.f32 %v627, 1.442695
    %v629 = vpow.pop %v628
    %v630 = vadd.f32 %v629, 1.0
    %v631 = vrcp.pop %v630
    %v632 = vmul.f32 1.0, %v631
    %v633 = vtanh.pop %v619
    %v634 = vxor.u32 %v620, 2147483648
    %v635 = vmul.f32 %v634, 1.442695
    %v636 = vpow.pop %v635
    %v637 = vadd.f32 %v636, 1.0
    %v638 = vrcp.pop %v637
    %v639 = vmul.f32 1.0, %v638
    %v640 = vmul.f32 %v632, %v528
    %v641 = vmul.f32 %v626, %v633
    %v642 = vadd.f32 %v640, %v641
    %v643 = vtanh.pop %v642
    %v644 = vmul.f32 %v639, %v643
    %s645 = sld [smem:[#allocation5 + %s526]]
    %v646 = vstv %s645
    %vm647 = vcmp.lt.s32.totalorder %v111, %v646
    %v648 = vsel %vm647, %v644, %v527
    %v649 = vsel %vm647, %v642, %v528
    %650 = vst [vmem:[#allocation2] sm:$0xff] %v648
    %651 = vst [vmem:[#allocation3] sm:$0xff] %v649
    %s652 = scalar_lea.vmem [#allocation12], 16
    %653 = vst [vmem:[%s652] sm:$0xff] %v648
    %s654 = sadd.s32 %s112, 3
    %v655 = vld [vmem:[#allocation2] sm:$0xff]
    %v656 = vld [vmem:[#allocation3] sm:$0xff]
    %s657 = scalar_lea.vmem [#allocation6], 96
    %v658 = vld [vmem:[%s657] sm:$0xff]
    %v659 = vld [vmem:[%s657 + $0x8] sm:$0xff]
    %v660 = vld [vmem:[%s657 + $0x10] sm:$0xff]
    %v661 = vld [vmem:[%s657 + $0x18] sm:$0xff]
    %v662 = vpack.c.bf16 %v655, %v655
    %663 = vmatprep.subr.bf16.mxu0 %v217
    %664 = vmatpush1.bf16.msra.mxu0 %v216
    %665 = vmatprep.subr.bf16.mxu0 %v221
    %666 = vmatpush1.bf16.msra.mxu0 %v220
    %667 = vmatprep.subr.bf16.mxu0 %v225
    %668 = vmatpush1.bf16.msra.mxu0 %v224
    %669 = vmatprep.subr.bf16.mxu0 %v229
    %670 = vmatpush1.bf16.msra.mxu0 %v228
    %671 = vmatprep.subr.bf16.mxu0 %v233
    %672 = vmatpush1.bf16.msra.mxu0 %v232
    %673 = vmatprep.subr.bf16.mxu0 %v237
    %674 = vmatpush1.bf16.msra.mxu0 %v236
    %675 = vmatprep.subr.bf16.mxu0 %v241
    %676 = vmatpush1.bf16.msra.mxu0 %v240
    %677 = vmatprep.subr.bf16.mxu0 %v245
    %678 = vmatpush1.bf16.msra.mxu0 %v244
    %679 = vmatprep.subr.bf16.mxu0 0
    %680 = vmatpush1.bf16.msra.mxu0 0
    %681 = vmatprep.subr.bf16.mxu0 0
    %682 = vmatpush1.bf16.msra.mxu0 0
    %683 = vmatprep.subr.bf16.mxu0 0
    %684 = vmatpush1.bf16.msra.mxu0 0
    %685 = vmatprep.subr.bf16.mxu0 0
    %686 = vmatpush1.bf16.msra.mxu0 0
    %687 = vmatprep.subr.bf16.mxu0 0
    %688 = vmatpush1.bf16.msra.mxu0 0
    %689 = vmatprep.subr.bf16.mxu0 0
    %690 = vmatpush1.bf16.msra.mxu0 0
    %691 = vmatprep.subr.bf16.mxu0 0
    %692 = vmatpush1.bf16.msra.mxu0 0
    %693 = vmatprep.subr.bf16.mxu0 0
    %694 = vmatpush1.bf16.msra.mxu0 0
    %695 = vmatprep.mubr.bf16.mxu0 0
    %696 = vmatmul.mubr.bf16.gmra.mrb[0].mxu0 %v662
    %v697 = vpop.f32.mrb[0].mxu0
    %v698 = vadd.f32 0.0, %v697
    %v699 = vpop.f32.mrb[0].mxu0
    %v700 = vadd.f32 0.0, %v699
    %v701 = vpop.f32.mrb[0].mxu0
    %v702 = vpop.f32.mrb[0].mxu0
    %703 = vdwg.mxu0
    %704 = vmatprep.subr.bf16.mxu0 %v219
    %705 = vmatpush1.bf16.msra.mxu0 %v218
    %706 = vmatprep.subr.bf16.mxu0 %v223
    %707 = vmatpush1.bf16.msra.mxu0 %v222
    %708 = vmatprep.subr.bf16.mxu0 %v227
    %709 = vmatpush1.bf16.msra.mxu0 %v226
    %710 = vmatprep.subr.bf16.mxu0 %v231
    %711 = vmatpush1.bf16.msra.mxu0 %v230
    %712 = vmatprep.subr.bf16.mxu0 %v235
    %713 = vmatpush1.bf16.msra.mxu0 %v234
    %714 = vmatprep.subr.bf16.mxu0 %v239
    %715 = vmatpush1.bf16.msra.mxu0 %v238
    %716 = vmatprep.subr.bf16.mxu0 %v243
    %717 = vmatpush1.bf16.msra.mxu0 %v242
    %718 = vmatprep.subr.bf16.mxu0 %v247
    %719 = vmatpush1.bf16.msra.mxu0 %v246
    %720 = vmatprep.subr.bf16.mxu0 0
    %721 = vmatpush1.bf16.msra.mxu0 0
    %722 = vmatprep.subr.bf16.mxu0 0
    %723 = vmatpush1.bf16.msra.mxu0 0
    %724 = vmatprep.subr.bf16.mxu0 0
    %725 = vmatpush1.bf16.msra.mxu0 0
    %726 = vmatprep.subr.bf16.mxu0 0
    %727 = vmatpush1.bf16.msra.mxu0 0
    %728 = vmatprep.subr.bf16.mxu0 0
    %729 = vmatpush1.bf16.msra.mxu0 0
    %730 = vmatprep.subr.bf16.mxu0 0
    %731 = vmatpush1.bf16.msra.mxu0 0
    %732 = vmatprep.subr.bf16.mxu0 0
    %733 = vmatpush1.bf16.msra.mxu0 0
    %734 = vmatprep.subr.bf16.mxu0 0
    %735 = vmatpush1.bf16.msra.mxu0 0
    %736 = vmatprep.mubr.bf16.mxu0 0
    %737 = vmatmul.mubr.bf16.gmra.mrb[0].mxu0 %v662
    %v738 = vpop.f32.mrb[0].mxu0
    %v739 = vadd.f32 0.0, %v738
    %v740 = vpop.f32.mrb[0].mxu0
    %v741 = vadd.f32 0.0, %v740
    %v742 = vpop.f32.mrb[0].mxu0
    %v743 = vpop.f32.mrb[0].mxu0
    %744 = vdwg.mxu0
    %v745 = vadd.f32 %v658, %v698
    %v746 = vadd.f32 %v659, %v700
    %v747 = vadd.f32 %v660, %v739
    %v748 = vadd.f32 %v661, %v741
    %v749 = vxor.u32 %v745, 2147483648
    %v750 = vmul.f32 %v749, 1.442695
    %v751 = vpow.pop %v750
    %v752 = vadd.f32 %v751, 1.0
    %v753 = vrcp.pop %v752
    %v754 = vmul.f32 1.0, %v753
    %v755 = vxor.u32 %v746, 2147483648
    %v756 = vmul.f32 %v755, 1.442695
    %v757 = vpow.pop %v756
    %v758 = vadd.f32 %v757, 1.0
    %v759 = vrcp.pop %v758
    %v760 = vmul.f32 1.0, %v759
    %v761 = vtanh.pop %v747
    %v762 = vxor.u32 %v748, 2147483648
    %v763 = vmul.f32 %v762, 1.442695
    %v764 = vpow.pop %v763
    %v765 = vadd.f32 %v764, 1.0
    %v766 = vrcp.pop %v765
    %v767 = vmul.f32 1.0, %v766
    %v768 = vmul.f32 %v760, %v656
    %v769 = vmul.f32 %v754, %v761
    %v770 = vadd.f32 %v768, %v769
    %v771 = vtanh.pop %v770
    %v772 = vmul.f32 %v767, %v771
    %s773 = sld [smem:[#allocation5 + %s654]]
    %v774 = vstv %s773
    %vm775 = vcmp.lt.s32.totalorder %v111, %v774
    %v776 = vsel %vm775, %v772, %v655
    %v777 = vsel %vm775, %v770, %v656
    %778 = vst [vmem:[#allocation2] sm:$0xff] %v776
    %779 = vst [vmem:[#allocation3] sm:$0xff] %v777
    %s780 = scalar_lea.vmem [#allocation12], 24
    %781 = vst [vmem:[%s780] sm:$0xff] %v776
    %s782 = sadd.s32 %s112, 4
    %v783 = vld [vmem:[#allocation2] sm:$0xff]
    %v784 = vld [vmem:[#allocation3] sm:$0xff]
    %s785 = scalar_lea.vmem [#allocation6], 128
    %v786 = vld [vmem:[%s785] sm:$0xff]
    %v787 = vld [vmem:[%s785 + $0x8] sm:$0xff]
    %v788 = vld [vmem:[%s785 + $0x10] sm:$0xff]
    %v789 = vld [vmem:[%s785 + $0x18] sm:$0xff]
    %v790 = vpack.c.bf16 %v783, %v783
    %791 = vmatprep.subr.bf16.mxu0 %v217
    %792 = vmatpush1.bf16.msra.mxu0 %v216
    %793 = vmatprep.subr.bf16.mxu0 %v221
    %794 = vmatpush1.bf16.msra.mxu0 %v220
    %795 = vmatprep.subr.bf16.mxu0 %v225
    %796 = vmatpush1.bf16.msra.mxu0 %v224
    %797 = vmatprep.subr.bf16.mxu0 %v229
    %798 = vmatpush1.bf16.msra.mxu0 %v228
    %799 = vmatprep.subr.bf16.mxu0 %v233
    %800 = vmatpush1.bf16.msra.mxu0 %v232
    %801 = vmatprep.subr.bf16.mxu0 %v237
    %802 = vmatpush1.bf16.msra.mxu0 %v236
    %803 = vmatprep.subr.bf16.mxu0 %v241
    %804 = vmatpush1.bf16.msra.mxu0 %v240
    %805 = vmatprep.subr.bf16.mxu0 %v245
    %806 = vmatpush1.bf16.msra.mxu0 %v244
    %807 = vmatprep.subr.bf16.mxu0 0
    %808 = vmatpush1.bf16.msra.mxu0 0
    %809 = vmatprep.subr.bf16.mxu0 0
    %810 = vmatpush1.bf16.msra.mxu0 0
    %811 = vmatprep.subr.bf16.mxu0 0
    %812 = vmatpush1.bf16.msra.mxu0 0
    %813 = vmatprep.subr.bf16.mxu0 0
    %814 = vmatpush1.bf16.msra.mxu0 0
    %815 = vmatprep.subr.bf16.mxu0 0
    %816 = vmatpush1.bf16.msra.mxu0 0
    %817 = vmatprep.subr.bf16.mxu0 0
    %818 = vmatpush1.bf16.msra.mxu0 0
    %819 = vmatprep.subr.bf16.mxu0 0
    %820 = vmatpush1.bf16.msra.mxu0 0
    %821 = vmatprep.subr.bf16.mxu0 0
    %822 = vmatpush1.bf16.msra.mxu0 0
    %823 = vmatprep.mubr.bf16.mxu0 0
    %824 = vmatmul.mubr.bf16.gmra.mrb[0].mxu0 %v790
    %v825 = vpop.f32.mrb[0].mxu0
    %v826 = vadd.f32 0.0, %v825
    %v827 = vpop.f32.mrb[0].mxu0
    %v828 = vadd.f32 0.0, %v827
    %v829 = vpop.f32.mrb[0].mxu0
    %v830 = vpop.f32.mrb[0].mxu0
    %831 = vdwg.mxu0
    %832 = vmatprep.subr.bf16.mxu0 %v219
    %833 = vmatpush1.bf16.msra.mxu0 %v218
    %834 = vmatprep.subr.bf16.mxu0 %v223
    %835 = vmatpush1.bf16.msra.mxu0 %v222
    %836 = vmatprep.subr.bf16.mxu0 %v227
    %837 = vmatpush1.bf16.msra.mxu0 %v226
    %838 = vmatprep.subr.bf16.mxu0 %v231
    %839 = vmatpush1.bf16.msra.mxu0 %v230
    %840 = vmatprep.subr.bf16.mxu0 %v235
    %841 = vmatpush1.bf16.msra.mxu0 %v234
    %842 = vmatprep.subr.bf16.mxu0 %v239
    %843 = vmatpush1.bf16.msra.mxu0 %v238
    %844 = vmatprep.subr.bf16.mxu0 %v243
    %845 = vmatpush1.bf16.msra.mxu0 %v242
    %846 = vmatprep.subr.bf16.mxu0 %v247
    %847 = vmatpush1.bf16.msra.mxu0 %v246
    %848 = vmatprep.subr.bf16.mxu0 0
    %849 = vmatpush1.bf16.msra.mxu0 0
    %850 = vmatprep.subr.bf16.mxu0 0
    %851 = vmatpush1.bf16.msra.mxu0 0
    %852 = vmatprep.subr.bf16.mxu0 0
    %853 = vmatpush1.bf16.msra.mxu0 0
    %854 = vmatprep.subr.bf16.mxu0 0
    %855 = vmatpush1.bf16.msra.mxu0 0
    %856 = vmatprep.subr.bf16.mxu0 0
    %857 = vmatpush1.bf16.msra.mxu0 0
    %858 = vmatprep.subr.bf16.mxu0 0
    %859 = vmatpush1.bf16.msra.mxu0 0
    %860 = vmatprep.subr.bf16.mxu0 0
    %861 = vmatpush1.bf16.msra.mxu0 0
    %862 = vmatprep.subr.bf16.mxu0 0
    %863 = vmatpush1.bf16.msra.mxu0 0
    %864 = vmatprep.mubr.bf16.mxu0 0
    %865 = vmatmul.mubr.bf16.gmra.mrb[0].mxu0 %v790
    %v866 = vpop.f32.mrb[0].mxu0
    %v867 = vadd.f32 0.0, %v866
    %v868 = vpop.f32.mrb[0].mxu0
    %v869 = vadd.f32 0.0, %v868
    %v870 = vpop.f32.mrb[0].mxu0
    %v871 = vpop.f32.mrb[0].mxu0
    %872 = vdwg.mxu0
    %v873 = vadd.f32 %v786, %v826
    %v874 = vadd.f32 %v787, %v828
    %v875 = vadd.f32 %v788, %v867
    %v876 = vadd.f32 %v789, %v869
    %v877 = vxor.u32 %v873, 2147483648
    %v878 = vmul.f32 %v877, 1.442695
    %v879 = vpow.pop %v878
    %v880 = vadd.f32 %v879, 1.0
    %v881 = vrcp.pop %v880
    %v882 = vmul.f32 1.0, %v881
    %v883 = vxor.u32 %v874, 2147483648
    %v884 = vmul.f32 %v883, 1.442695
    %v885 = vpow.pop %v884
    %v886 = vadd.f32 %v885, 1.0
    %v887 = vrcp.pop %v886
    %v888 = vmul.f32 1.0, %v887
    %v889 = vtanh.pop %v875
    %v890 = vxor.u32 %v876, 2147483648
    %v891 = vmul.f32 %v890, 1.442695
    %v892 = vpow.pop %v891
    %v893 = vadd.f32 %v892, 1.0
    %v894 = vrcp.pop %v893
    %v895 = vmul.f32 1.0, %v894
    %v896 = vmul.f32 %v888, %v784
    %v897 = vmul.f32 %v882, %v889
    %v898 = vadd.f32 %v896, %v897
    %v899 = vtanh.pop %v898
    %v900 = vmul.f32 %v895, %v899
    %s901 = sld [smem:[#allocation5 + %s782]]
    %v902 = vstv %s901
    %vm903 = vcmp.lt.s32.totalorder %v111, %v902
    %v904 = vsel %vm903, %v900, %v783
    %v905 = vsel %vm903, %v898, %v784
    %906 = vst [vmem:[#allocation2] sm:$0xff] %v904
    %907 = vst [vmem:[#allocation3] sm:$0xff] %v905
    %s908 = scalar_lea.vmem [#allocation12], 32
    %909 = vst [vmem:[%s908] sm:$0xff] %v904
    %s910 = sadd.s32 %s112, 5
    %v911 = vld [vmem:[#allocation2] sm:$0xff]
    %v912 = vld [vmem:[#allocation3] sm:$0xff]
    %s913 = scalar_lea.vmem [#allocation6], 160
    %v914 = vld [vmem:[%s913] sm:$0xff]
    %v915 = vld [vmem:[%s913 + $0x8] sm:$0xff]
    %v916 = vld [vmem:[%s913 + $0x10] sm:$0xff]
    %v917 = vld [vmem:[%s913 + $0x18] sm:$0xff]
    %v918 = vpack.c.bf16 %v911, %v911
    %919 = vmatprep.subr.bf16.mxu0 %v217
    %920 = vmatpush1.bf16.msra.mxu0 %v216
    %921 = vmatprep.subr.bf16.mxu0 %v221
    %922 = vmatpush1.bf16.msra.mxu0 %v220
    %923 = vmatprep.subr.bf16.mxu0 %v225
    %924 = vmatpush1.bf16.msra.mxu0 %v224
    %925 = vmatprep.subr.bf16.mxu0 %v229
    %926 = vmatpush1.bf16.msra.mxu0 %v228
    %927 = vmatprep.subr.bf16.mxu0 %v233
    %928 = vmatpush1.bf16.msra.mxu0 %v232
    %929 = vmatprep.subr.bf16.mxu0 %v237
    %930 = vmatpush1.bf16.msra.mxu0 %v236
    %931 = vmatprep.subr.bf16.mxu0 %v241
    %932 = vmatpush1.bf16.msra.mxu0 %v240
    %933 = vmatprep.subr.bf16.mxu0 %v245
    %934 = vmatpush1.bf16.msra.mxu0 %v244
    %935 = vmatprep.subr.bf16.mxu0 0
    %936 = vmatpush1.bf16.msra.mxu0 0
    %937 = vmatprep.subr.bf16.mxu0 0
    %938 = vmatpush1.bf16.msra.mxu0 0
    %939 = vmatprep.subr.bf16.mxu0 0
    %940 = vmatpush1.bf16.msra.mxu0 0
    %941 = vmatprep.subr.bf16.mxu0 0
    %942 = vmatpush1.bf16.msra.mxu0 0
    %943 = vmatprep.subr.bf16.mxu0 0
    %944 = vmatpush1.bf16.msra.mxu0 0
    %945 = vmatprep.subr.bf16.mxu0 0
    %946 = vmatpush1.bf16.msra.mxu0 0
    %947 = vmatprep.subr.bf16.mxu0 0
    %948 = vmatpush1.bf16.msra.mxu0 0
    %949 = vmatprep.subr.bf16.mxu0 0
    %950 = vmatpush1.bf16.msra.mxu0 0
    %951 = vmatprep.mubr.bf16.mxu0 0
    %952 = vmatmul.mubr.bf16.gmra.mrb[0].mxu0 %v918
    %v953 = vpop.f32.mrb[0].mxu0
    %v954 = vadd.f32 0.0, %v953
    %v955 = vpop.f32.mrb[0].mxu0
    %v956 = vadd.f32 0.0, %v955
    %v957 = vpop.f32.mrb[0].mxu0
    %v958 = vpop.f32.mrb[0].mxu0
    %959 = vdwg.mxu0
    %960 = vmatprep.subr.bf16.mxu0 %v219
    %961 = vmatpush1.bf16.msra.mxu0 %v218
    %962 = vmatprep.subr.bf16.mxu0 %v223
    %963 = vmatpush1.bf16.msra.mxu0 %v222
    %964 = vmatprep.subr.bf16.mxu0 %v227
    %965 = vmatpush1.bf16.msra.mxu0 %v226
    %966 = vmatprep.subr.bf16.mxu0 %v231
    %967 = vmatpush1.bf16.msra.mxu0 %v230
    %968 = vmatprep.subr.bf16.mxu0 %v235
    %969 = vmatpush1.bf16.msra.mxu0 %v234
    %970 = vmatprep.subr.bf16.mxu0 %v239
    %971 = vmatpush1.bf16.msra.mxu0 %v238
    %972 = vmatprep.subr.bf16.mxu0 %v243
    %973 = vmatpush1.bf16.msra.mxu0 %v242
    %974 = vmatprep.subr.bf16.mxu0 %v247
    %975 = vmatpush1.bf16.msra.mxu0 %v246
    %976 = vmatprep.subr.bf16.mxu0 0
    %977 = vmatpush1.bf16.msra.mxu0 0
    %978 = vmatprep.subr.bf16.mxu0 0
    %979 = vmatpush1.bf16.msra.mxu0 0
    %980 = vmatprep.subr.bf16.mxu0 0
    %981 = vmatpush1.bf16.msra.mxu0 0
    %982 = vmatprep.subr.bf16.mxu0 0
    %983 = vmatpush1.bf16.msra.mxu0 0
    %984 = vmatprep.subr.bf16.mxu0 0
    %985 = vmatpush1.bf16.msra.mxu0 0
    %986 = vmatprep.subr.bf16.mxu0 0
    %987 = vmatpush1.bf16.msra.mxu0 0
    %988 = vmatprep.subr.bf16.mxu0 0
    %989 = vmatpush1.bf16.msra.mxu0 0
    %990 = vmatprep.subr.bf16.mxu0 0
    %991 = vmatpush1.bf16.msra.mxu0 0
    %992 = vmatprep.mubr.bf16.mxu0 0
    %993 = vmatmul.mubr.bf16.gmra.mrb[0].mxu0 %v918
    %v994 = vpop.f32.mrb[0].mxu0
    %v995 = vadd.f32 0.0, %v994
    %v996 = vpop.f32.mrb[0].mxu0
    %v997 = vadd.f32 0.0, %v996
    %v998 = vpop.f32.mrb[0].mxu0
    %v999 = vpop.f32.mrb[0].mxu0
    %1000 = vdwg.mxu0
    %v1001 = vadd.f32 %v914, %v954
    %v1002 = vadd.f32 %v915, %v956
    %v1003 = vadd.f32 %v916, %v995
    %v1004 = vadd.f32 %v917, %v997
    %v1005 = vxor.u32 %v1001, 2147483648
    %v1006 = vmul.f32 %v1005, 1.442695
    %v1007 = vpow.pop %v1006
    %v1008 = vadd.f32 %v1007, 1.0
    %v1009 = vrcp.pop %v1008
    %v1010 = vmul.f32 1.0, %v1009
    %v1011 = vxor.u32 %v1002, 2147483648
    %v1012 = vmul.f32 %v1011, 1.442695
    %v1013 = vpow.pop %v1012
    %v1014 = vadd.f32 %v1013, 1.0
    %v1015 = vrcp.pop %v1014
    %v1016 = vmul.f32 1.0, %v1015
    %v1017 = vtanh.pop %v1003
    %v1018 = vxor.u32 %v1004, 2147483648
    %v1019 = vmul.f32 %v1018, 1.442695
    %v1020 = vpow.pop %v1019
    %v1021 = vadd.f32 %v1020, 1.0
    %v1022 = vrcp.pop %v1021
    %v1023 = vmul.f32 1.0, %v1022
    %v1024 = vmul.f32 %v1016, %v912
    %v1025 = vmul.f32 %v1010, %v1017
    %v1026 = vadd.f32 %v1024, %v1025
    %v1027 = vtanh.pop %v1026
    %v1028 = vmul.f32 %v1023, %v1027
    %s1029 = sld [smem:[#allocation5 + %s910]]
    %v1030 = vstv %s1029
    %vm1031 = vcmp.lt.s32.totalorder %v111, %v1030
    %v1032 = vsel %vm1031, %v1028, %v911
    %v1033 = vsel %vm1031, %v1026, %v912
    %1034 = vst [vmem:[#allocation2] sm:$0xff] %v1032
    %1035 = vst [vmem:[#allocation3] sm:$0xff] %v1033
    %s1036 = scalar_lea.vmem [#allocation12], 40
    %1037 = vst [vmem:[%s1036] sm:$0xff] %v1032
    %s1038 = sadd.s32 %s112, 6
    %v1039 = vld [vmem:[#allocation2] sm:$0xff]
    %v1040 = vld [vmem:[#allocation3] sm:$0xff]
    %s1041 = scalar_lea.vmem [#allocation6], 192
    %v1042 = vld [vmem:[%s1041] sm:$0xff]
    %v1043 = vld [vmem:[%s1041 + $0x8] sm:$0xff]
    %v1044 = vld [vmem:[%s1041 + $0x10] sm:$0xff]
    %v1045 = vld [vmem:[%s1041 + $0x18] sm:$0xff]
    %v1046 = vpack.c.bf16 %v1039, %v1039
    %1047 = vmatprep.subr.bf16.mxu0 %v217
    %1048 = vmatpush1.bf16.msra.mxu0 %v216
    %1049 = vmatprep.subr.bf16.mxu0 %v221
    %1050 = vmatpush1.bf16.msra.mxu0 %v220
    %1051 = vmatprep.subr.bf16.mxu0 %v225
    %1052 = vmatpush1.bf16.msra.mxu0 %v224
    %1053 = vmatprep.subr.bf16.mxu0 %v229
    %1054 = vmatpush1.bf16.msra.mxu0 %v228
    %1055 = vmatprep.subr.bf16.mxu0 %v233
    %1056 = vmatpush1.bf16.msra.mxu0 %v232
    %1057 = vmatprep.subr.bf16.mxu0 %v237
    %1058 = vmatpush1.bf16.msra.mxu0 %v236
    %1059 = vmatprep.subr.bf16.mxu0 %v241
    %1060 = vmatpush1.bf16.msra.mxu0 %v240
    %1061 = vmatprep.subr.bf16.mxu0 %v245
    %1062 = vmatpush1.bf16.msra.mxu0 %v244
    %1063 = vmatprep.subr.bf16.mxu0 0
    %1064 = vmatpush1.bf16.msra.mxu0 0
    %1065 = vmatprep.subr.bf16.mxu0 0
    %1066 = vmatpush1.bf16.msra.mxu0 0
    %1067 = vmatprep.subr.bf16.mxu0 0
    %1068 = vmatpush1.bf16.msra.mxu0 0
    %1069 = vmatprep.subr.bf16.mxu0 0
    %1070 = vmatpush1.bf16.msra.mxu0 0
    %1071 = vmatprep.subr.bf16.mxu0 0
    %1072 = vmatpush1.bf16.msra.mxu0 0
    %1073 = vmatprep.subr.bf16.mxu0 0
    %1074 = vmatpush1.bf16.msra.mxu0 0
    %1075 = vmatprep.subr.bf16.mxu0 0
    %1076 = vmatpush1.bf16.msra.mxu0 0
    %1077 = vmatprep.subr.bf16.mxu0 0
    %1078 = vmatpush1.bf16.msra.mxu0 0
    %1079 = vmatprep.mubr.bf16.mxu0 0
    %1080 = vmatmul.mubr.bf16.gmra.mrb[0].mxu0 %v1046
    %v1081 = vpop.f32.mrb[0].mxu0
    %v1082 = vadd.f32 0.0, %v1081
    %v1083 = vpop.f32.mrb[0].mxu0
    %v1084 = vadd.f32 0.0, %v1083
    %v1085 = vpop.f32.mrb[0].mxu0
    %v1086 = vpop.f32.mrb[0].mxu0
    %1087 = vdwg.mxu0
    %1088 = vmatprep.subr.bf16.mxu0 %v219
    %1089 = vmatpush1.bf16.msra.mxu0 %v218
    %1090 = vmatprep.subr.bf16.mxu0 %v223
    %1091 = vmatpush1.bf16.msra.mxu0 %v222
    %1092 = vmatprep.subr.bf16.mxu0 %v227
    %1093 = vmatpush1.bf16.msra.mxu0 %v226
    %1094 = vmatprep.subr.bf16.mxu0 %v231
    %1095 = vmatpush1.bf16.msra.mxu0 %v230
    %1096 = vmatprep.subr.bf16.mxu0 %v235
    %1097 = vmatpush1.bf16.msra.mxu0 %v234
    %1098 = vmatprep.subr.bf16.mxu0 %v239
    %1099 = vmatpush1.bf16.msra.mxu0 %v238
    %1100 = vmatprep.subr.bf16.mxu0 %v243
    %1101 = vmatpush1.bf16.msra.mxu0 %v242
    %1102 = vmatprep.subr.bf16.mxu0 %v247
    %1103 = vmatpush1.bf16.msra.mxu0 %v246
    %1104 = vmatprep.subr.bf16.mxu0 0
    %1105 = vmatpush1.bf16.msra.mxu0 0
    %1106 = vmatprep.subr.bf16.mxu0 0
    %1107 = vmatpush1.bf16.msra.mxu0 0
    %1108 = vmatprep.subr.bf16.mxu0 0
    %1109 = vmatpush1.bf16.msra.mxu0 0
    %1110 = vmatprep.subr.bf16.mxu0 0
    %1111 = vmatpush1.bf16.msra.mxu0 0
    %1112 = vmatprep.subr.bf16.mxu0 0
    %1113 = vmatpush1.bf16.msra.mxu0 0
    %1114 = vmatprep.subr.bf16.mxu0 0
    %1115 = vmatpush1.bf16.msra.mxu0 0
    %1116 = vmatprep.subr.bf16.mxu0 0
    %1117 = vmatpush1.bf16.msra.mxu0 0
    %1118 = vmatprep.subr.bf16.mxu0 0
    %1119 = vmatpush1.bf16.msra.mxu0 0
    %1120 = vmatprep.mubr.bf16.mxu0 0
    %1121 = vmatmul.mubr.bf16.gmra.mrb[0].mxu0 %v1046
    %v1122 = vpop.f32.mrb[0].mxu0
    %v1123 = vadd.f32 0.0, %v1122
    %v1124 = vpop.f32.mrb[0].mxu0
    %v1125 = vadd.f32 0.0, %v1124
    %v1126 = vpop.f32.mrb[0].mxu0
    %v1127 = vpop.f32.mrb[0].mxu0
    %1128 = vdwg.mxu0
    %v1129 = vadd.f32 %v1042, %v1082
    %v1130 = vadd.f32 %v1043, %v1084
    %v1131 = vadd.f32 %v1044, %v1123
    %v1132 = vadd.f32 %v1045, %v1125
    %v1133 = vxor.u32 %v1129, 2147483648
    %v1134 = vmul.f32 %v1133, 1.442695
    %v1135 = vpow.pop %v1134
    %v1136 = vadd.f32 %v1135, 1.0
    %v1137 = vrcp.pop %v1136
    %v1138 = vmul.f32 1.0, %v1137
    %v1139 = vxor.u32 %v1130, 2147483648
    %v1140 = vmul.f32 %v1139, 1.442695
    %v1141 = vpow.pop %v1140
    %v1142 = vadd.f32 %v1141, 1.0
    %v1143 = vrcp.pop %v1142
    %v1144 = vmul.f32 1.0, %v1143
    %v1145 = vtanh.pop %v1131
    %v1146 = vxor.u32 %v1132, 2147483648
    %v1147 = vmul.f32 %v1146, 1.442695
    %v1148 = vpow.pop %v1147
    %v1149 = vadd.f32 %v1148, 1.0
    %v1150 = vrcp.pop %v1149
    %v1151 = vmul.f32 1.0, %v1150
    %v1152 = vmul.f32 %v1144, %v1040
    %v1153 = vmul.f32 %v1138, %v1145
    %v1154 = vadd.f32 %v1152, %v1153
    %v1155 = vtanh.pop %v1154
    %v1156 = vmul.f32 %v1151, %v1155
    %s1157 = sld [smem:[#allocation5 + %s1038]]
    %v1158 = vstv %s1157
    %vm1159 = vcmp.lt.s32.totalorder %v111, %v1158
    %v1160 = vsel %vm1159, %v1156, %v1039
    %v1161 = vsel %vm1159, %v1154, %v1040
    %1162 = vst [vmem:[#allocation2] sm:$0xff] %v1160
    %1163 = vst [vmem:[#allocation3] sm:$0xff] %v1161
    %s1164 = scalar_lea.vmem [#allocation12], 48
    %1165 = vst [vmem:[%s1164] sm:$0xff] %v1160
    %s1166 = sadd.s32 %s112, 7
    %v1167 = vld [vmem:[#allocation2] sm:$0xff]
    %v1168 = vld [vmem:[#allocation3] sm:$0xff]
    %s1169 = scalar_lea.vmem [#allocation6], 224
    %v1170 = vld [vmem:[%s1169] sm:$0xff]
    %v1171 = vld [vmem:[%s1169 + $0x8] sm:$0xff]
    %v1172 = vld [vmem:[%s1169 + $0x10] sm:$0xff]
    %v1173 = vld [vmem:[%s1169 + $0x18] sm:$0xff]
    %v1174 = vpack.c.bf16 %v1167, %v1167
    %1175 = vmatprep.subr.bf16.mxu0 %v217
    %1176 = vmatpush1.bf16.msra.mxu0 %v216
    %1177 = vmatprep.subr.bf16.mxu0 %v221
    %1178 = vmatpush1.bf16.msra.mxu0 %v220
    %1179 = vmatprep.subr.bf16.mxu0 %v225
    %1180 = vmatpush1.bf16.msra.mxu0 %v224
    %1181 = vmatprep.subr.bf16.mxu0 %v229
    %1182 = vmatpush1.bf16.msra.mxu0 %v228
    %1183 = vmatprep.subr.bf16.mxu0 %v233
    %1184 = vmatpush1.bf16.msra.mxu0 %v232
    %1185 = vmatprep.subr.bf16.mxu0 %v237
    %1186 = vmatpush1.bf16.msra.mxu0 %v236
    %1187 = vmatprep.subr.bf16.mxu0 %v241
    %1188 = vmatpush1.bf16.msra.mxu0 %v240
    %1189 = vmatprep.subr.bf16.mxu0 %v245
    %1190 = vmatpush1.bf16.msra.mxu0 %v244
    %1191 = vmatprep.subr.bf16.mxu0 0
    %1192 = vmatpush1.bf16.msra.mxu0 0
    %1193 = vmatprep.subr.bf16.mxu0 0
    %1194 = vmatpush1.bf16.msra.mxu0 0
    %1195 = vmatprep.subr.bf16.mxu0 0
    %1196 = vmatpush1.bf16.msra.mxu0 0
    %1197 = vmatprep.subr.bf16.mxu0 0
    %1198 = vmatpush1.bf16.msra.mxu0 0
    %1199 = vmatprep.subr.bf16.mxu0 0
    %1200 = vmatpush1.bf16.msra.mxu0 0
    %1201 = vmatprep.subr.bf16.mxu0 0
    %1202 = vmatpush1.bf16.msra.mxu0 0
    %1203 = vmatprep.subr.bf16.mxu0 0
    %1204 = vmatpush1.bf16.msra.mxu0 0
    %1205 = vmatprep.subr.bf16.mxu0 0
    %1206 = vmatpush1.bf16.msra.mxu0 0
    %1207 = vmatprep.mubr.bf16.mxu0 0
    %1208 = vmatmul.mubr.bf16.gmra.mrb[0].mxu0 %v1174
    %v1209 = vpop.f32.mrb[0].mxu0
    %v1210 = vadd.f32 0.0, %v1209
    %v1211 = vpop.f32.mrb[0].mxu0
    %v1212 = vadd.f32 0.0, %v1211
    %v1213 = vpop.f32.mrb[0].mxu0
    %v1214 = vpop.f32.mrb[0].mxu0
    %1215 = vdwg.mxu0
    %1216 = vmatprep.subr.bf16.mxu0 %v219
    %1217 = vmatpush1.bf16.msra.mxu0 %v218
    %1218 = vmatprep.subr.bf16.mxu0 %v223
    %1219 = vmatpush1.bf16.msra.mxu0 %v222
    %1220 = vmatprep.subr.bf16.mxu0 %v227
    %1221 = vmatpush1.bf16.msra.mxu0 %v226
    %1222 = vmatprep.subr.bf16.mxu0 %v231
    %1223 = vmatpush1.bf16.msra.mxu0 %v230
    %1224 = vmatprep.subr.bf16.mxu0 %v235
    %1225 = vmatpush1.bf16.msra.mxu0 %v234
    %1226 = vmatprep.subr.bf16.mxu0 %v239
    %1227 = vmatpush1.bf16.msra.mxu0 %v238
    %1228 = vmatprep.subr.bf16.mxu0 %v243
    %1229 = vmatpush1.bf16.msra.mxu0 %v242
    %1230 = vmatprep.subr.bf16.mxu0 %v247
    %1231 = vmatpush1.bf16.msra.mxu0 %v246
    %1232 = vmatprep.subr.bf16.mxu0 0
    %1233 = vmatpush1.bf16.msra.mxu0 0
    %1234 = vmatprep.subr.bf16.mxu0 0
    %1235 = vmatpush1.bf16.msra.mxu0 0
    %1236 = vmatprep.subr.bf16.mxu0 0
    %1237 = vmatpush1.bf16.msra.mxu0 0
    %1238 = vmatprep.subr.bf16.mxu0 0
    %1239 = vmatpush1.bf16.msra.mxu0 0
    %1240 = vmatprep.subr.bf16.mxu0 0
    %1241 = vmatpush1.bf16.msra.mxu0 0
    %1242 = vmatprep.subr.bf16.mxu0 0
    %1243 = vmatpush1.bf16.msra.mxu0 0
    %1244 = vmatprep.subr.bf16.mxu0 0
    %1245 = vmatpush1.bf16.msra.mxu0 0
    %1246 = vmatprep.subr.bf16.mxu0 0
    %1247 = vmatpush1.bf16.msra.mxu0 0
    %1248 = vmatprep.mubr.bf16.mxu0 0
    %1249 = vmatmul.mubr.bf16.gmra.mrb[0].mxu0 %v1174
    %v1250 = vpop.f32.mrb[0].mxu0
    %v1251 = vadd.f32 0.0, %v1250
    %v1252 = vpop.f32.mrb[0].mxu0
    %v1253 = vadd.f32 0.0, %v1252
    %v1254 = vpop.f32.mrb[0].mxu0
    %v1255 = vpop.f32.mrb[0].mxu0
    %1256 = vdwg.mxu0
    %v1257 = vadd.f32 %v1170, %v1210
    %v1258 = vadd.f32 %v1171, %v1212
    %v1259 = vadd.f32 %v1172, %v1251
    %v1260 = vadd.f32 %v1173, %v1253
    %v1261 = vxor.u32 %v1257, 2147483648
    %v1262 = vmul.f32 %v1261, 1.442695
    %v1263 = vpow.pop %v1262
    %v1264 = vadd.f32 %v1263, 1.0
    %v1265 = vrcp.pop %v1264
    %v1266 = vmul.f32 1.0, %v1265
    %v1267 = vxor.u32 %v1258, 2147483648
    %v1268 = vmul.f32 %v1267, 1.442695
    %v1269 = vpow.pop %v1268
    %v1270 = vadd.f32 %v1269, 1.0
    %v1271 = vrcp.pop %v1270
    %v1272 = vmul.f32 1.0, %v1271
    %v1273 = vtanh.pop %v1259
    %v1274 = vxor.u32 %v1260, 2147483648
    %v1275 = vmul.f32 %v1274, 1.442695
    %v1276 = vpow.pop %v1275
    %v1277 = vadd.f32 %v1276, 1.0
    %v1278 = vrcp.pop %v1277
    %v1279 = vmul.f32 1.0, %v1278
    %v1280 = vmul.f32 %v1272, %v1168
    %v1281 = vmul.f32 %v1266, %v1273
    %v1282 = vadd.f32 %v1280, %v1281
    %v1283 = vtanh.pop %v1282
    %v1284 = vmul.f32 %v1279, %v1283
    %s1285 = sld [smem:[#allocation5 + %s1166]]
    %v1286 = vstv %s1285
    %vm1287 = vcmp.lt.s32.totalorder %v111, %v1286
    %v1288 = vsel %vm1287, %v1284, %v1167
    %v1289 = vsel %vm1287, %v1282, %v1168
    %1290 = vst [vmem:[#allocation2] sm:$0xff] %v1288
    %1291 = vst [vmem:[#allocation3] sm:$0xff] %v1289
    %s1292 = scalar_lea.vmem [#allocation12], 56
    %1293 = vst [vmem:[%s1292] sm:$0xff] %v1288
    // Predicated region
    $region34: #{tpu_custom_call.1} parent=1 // pred_check
      %p1294 = pneg %p67
    $region35: #{tpu_custom_call.1} parent=1 // pred_check_branch
      %1296 = sbr.rel (%p1294) target = $region37
    $region36: #{tpu_custom_call.1} parent=1 // pred_region
      %v1297 = vld [vmem:[#allocation2] sm:$0xff]
      %1298 = vst [vmem:[#allocation13] sm:$0xff] %v1297
      %v1299 = vld [vmem:[#allocation3] sm:$0xff]
      %1300 = vst [vmem:[#allocation15] sm:$0xff] %v1299
    $region37: #{tpu_custom_call.1} parent=1 // pred_fallthru
      _
    // Predicated region
    $region38: #{tpu_custom_call.1} parent=1 // pred_check
      _
    $region39: #{tpu_custom_call.1} parent=1 // pred_check_branch
      %1302 = sbr.rel (0) target = $region41
    $region40: #{tpu_custom_call.1} parent=1 // pred_region
      %s1304 = ssub.s32 1024, 1024
      %1305 = vsyncadd [#allocation8], %s1304
      %s1306 = sshll.u32 [#allocation12], 4
      %s1307 = int_to_ptr.vmem [resolvable:$true] %s1306
      %1312 = dma.vmem_to_hbm [thread:$0]  %s1307, 1024, %s5, [#allocation8], 128, 128, 8
    $region41: #{tpu_custom_call.1} parent=1 // pred_fallthru
      _
    // Predicated region
    $region42: #{tpu_custom_call.1} parent=1 // pred_check
      _
    $region43: #{tpu_custom_call.1} parent=1 // pred_check_branch
      %1314 = sbr.rel (0) target = $region45
    $region44: #{tpu_custom_call.1} parent=1 // pred_region
      %s1316 = ssub.s32 128, 128
      %1317 = vsyncadd [#allocation14], %s1316
      %s1319 = sshll.u32 [#allocation13], 4
      %s1320 = int_to_ptr.vmem [resolvable:$true] %s1319
      %1322 = dma.vmem_to_hbm [thread:$0]  %s1320, 128, %s6, [#allocation14]
    $region45: #{tpu_custom_call.1} parent=1 // pred_fallthru
      _
    // Predicated region
    $region46: #{tpu_custom_call.1} parent=1 // pred_check
      _
    $region47: #{tpu_custom_call.1} parent=1 // pred_check_branch
      %1324 = sbr.rel (0) target = $region49
    $region48: #{tpu_custom_call.1} parent=1 // pred_region
      %s1326 = ssub.s32 128, 128
      %1327 = vsyncadd [#allocation14], %s1326
      %s1329 = sshll.u32 [#allocation15], 4
      %s1330 = int_to_ptr.vmem [resolvable:$true] %s1329
      %1332 = dma.vmem_to_hbm [thread:$0]  %s1330, 128, %s7, [#allocation14]
    $region49: #{tpu_custom_call.1} parent=1 // pred_fallthru
      _
    // Predicated region
    $region50: #{tpu_custom_call.1} parent=1 // pred_check
      _
    $region51: #{tpu_custom_call.1} parent=1 // pred_check_branch
      %1334 = sbr.rel (0) target = $region53
    $region52: #{tpu_custom_call.1} parent=1 // pred_region
      %1335 = dma.done [#allocation8], 1024
    $region53: #{tpu_custom_call.1} parent=1 // pred_fallthru
      _
    // Predicated region
    $region54: #{tpu_custom_call.1} parent=1 // pred_check
      _
    $region55: #{tpu_custom_call.1} parent=1 // pred_check_branch
      %1337 = sbr.rel (0) target = $region57
    $region56: #{tpu_custom_call.1} parent=1 // pred_region
      %1338 = dma.done [#allocation14], 128
    $region57: #{tpu_custom_call.1} parent=1 // pred_fallthru
      _
    // Predicated region
    $region58: #{tpu_custom_call.1} parent=1 // pred_check
      _
    $region59: #{tpu_custom_call.1} parent=1 // pred_check_branch
      %1340 = sbr.rel (0) target = $region61
    $region60: #{tpu_custom_call.1} parent=1 // pred_region
      %1341 = dma.done [#allocation14], 128
    $region61: #{tpu_custom_call.1} parent=1 // pred_fallthru
      _
    %1342 = vsyncpa [#allocation7], 1
    %1343 = vsyncpa [#allocation10], 1
    %1344 = vsyncpa [#allocation8], 1
    %1345 = vsyncpa [#allocation14], 1

</llo_original>
